<compile_context>
chip_gen: v5e
topology: v5e:2x2
jax: 0.10.0
libtpu: 0.0.40
codegen_flags: <defaults>
</compile_context>

<pallas_src>
import math

import jax
import jax.numpy as jnp
from jax.experimental import pallas as pl
from jax.experimental.pallas import tpu as pltpu

X_DIM = 2            # x_dim
HIDDEN = 32          # hidden_dim
TIME_EMBED = 16      # time_embed_dim
HALF = TIME_EMBED // 2
NRESNET = 4          # nresnet
NEG_SLOPE = 0.01     # torch.nn.LeakyReLU default negative_slope

_SLAB_ROWS = 16      # input slab rows: [x0, x1, t, zeros...]
_NW = 9              # packed weight slots (8 weights + 1 bias matrix)


def _leaky(v):
    return jnp.where(v > 0, v, NEG_SLOPE * v)


def _round_up(a, m):
    return ((a + m - 1) // m) * m


# ----------------------------------------------------------------------------
# Kernel
# ----------------------------------------------------------------------------
def densenet_kernel(xt_ref, wm_ref, wf2_ref, out_ref):
    xt = xt_ref[...]                                   # [16, TB] (x0, x1, t, 0...)
    tb = xt.shape[1]
    x = xt[0:X_DIM, :]                                 # [2, TB]
    t = xt[X_DIM:X_DIM + 1, :]                         # [1, TB]

    # Sinusoidal timestep embedding, feature-major:
    #   rows 0:8  = cos(freq_k * t),  rows 8:16 = sin(freq_k * t)
    row = jax.lax.broadcasted_iota(jnp.int32, (TIME_EMBED, tb), 0)
    hi = row >= HALF
    kmod = jnp.where(hi, row - HALF, row).astype(jnp.float32)
    freq = jnp.exp(kmod * (-math.log(10000.0) / HALF))
    args = freq * t                                    # [16, TB]
    emb = jnp.where(hi, jnp.sin(args), jnp.cos(args))  # [16, TB]

    # combined input for the fused inputs_dense | time_dense matmul
    comb = jnp.concatenate([xt, emb], axis=0)          # [32, TB]

    bmat = wm_ref[8]                                   # [64, 32] bias matrix

    def matmul(slot, rhs, bias_col):
        z = jnp.dot(wm_ref[slot], rhs, preferred_element_type=jnp.float32)
        return z + bmat[:, bias_col:bias_col + 1]      # broadcast [64,1] bias

    # fused inputs_dense | time_dense (block-diagonal weight), leaky, add halves
    a = _leaky(matmul(0, comb, 0))                     # [64, TB]
    h = a[0:HIDDEN, :] + a[HIDDEN:2 * HIDDEN, :]       # [32, TB]

    # residual block: Linear + LeakyReLU + Linear
    h = _leaky(matmul(1, h, 1))[0:HIDDEN, :]
    h = matmul(2, h, 2)[0:HIDDEN, :]

    # 4x ResNetDense: residual|layer fused into one [64,32] matmul each
    for i in range(NRESNET):
        z = matmul(3 + i, h, 3 + i)                    # [64, TB]
        h = z[0:HIDDEN, :] + _leaky(z[HIDDEN:2 * HIDDEN, :])

    # final layer: Linear(32,64) + LeakyReLU + Linear(64,2)
    f1 = _leaky(matmul(7, h, 7))                       # [64, TB]
    out = jnp.dot(wf2_ref[...], f1, preferred_element_type=jnp.float32)
    out = out + bmat[0:X_DIM, 8:9]                     # [2, TB]

    # output = output + inputs
    out_ref[...] = out + x


# ----------------------------------------------------------------------------
# Parameter packing (done once, outside the kernel)
# ----------------------------------------------------------------------------
def pack_params(p):
    """Pack torch-layout ([out, in]) weights into one [9,64,32] slab + [2,64]."""
    wm = jnp.zeros((_NW, 2 * HIDDEN, HIDDEN), jnp.float32)
    # slot 0: block-diagonal fused [inputs_dense ; time_dense] acting on
    #         comb = [x(2), t(1), zeros(13), emb(16)]
    wm = wm.at[0, 0:HIDDEN, 0:X_DIM].set(p["win"])
    wm = wm.at[0, HIDDEN:2 * HIDDEN, _SLAB_ROWS:_SLAB_ROWS + TIME_EMBED].set(p["wt"])
    # slots 1,2: residual block (rows 32:64 stay zero)
    wm = wm.at[1, 0:HIDDEN, :].set(p["wr1"])
    wm = wm.at[2, 0:HIDDEN, :].set(p["wr2"])
    # slots 3..6: ResNetDense i, residual on rows 0:32, layer on rows 32:64
    for i in range(NRESNET):
        wm = wm.at[3 + i, 0:HIDDEN, :].set(p["wres"][i])
        wm = wm.at[3 + i, HIDDEN:2 * HIDDEN, :].set(p["wlay"][i])
    # slot 7: final_layer first Linear (32 -> 64)
    wm = wm.at[7].set(p["wf1"])
    # slot 8: bias matrix, one bias per column
    b = jnp.zeros((2 * HIDDEN, HIDDEN), jnp.float32)
    b = b.at[0:HIDDEN, 0].set(p["bin"])
    b = b.at[HIDDEN:2 * HIDDEN, 0].set(p["bt"])
    b = b.at[0:HIDDEN, 1].set(p["br1"])
    b = b.at[0:HIDDEN, 2].set(p["br2"])
    for i in range(NRESNET):
        b = b.at[0:HIDDEN, 3 + i].set(p["bres"][i])
        b = b.at[HIDDEN:2 * HIDDEN, 3 + i].set(p["blay"][i])
    b = b.at[:, 7].set(p["bf1"])
    b = b.at[0:X_DIM, 8].set(p["bf2"])
    wm = wm.at[8].set(b)
    return wm, p["wf2"].astype(jnp.float32)            # [2, 64]


# ----------------------------------------------------------------------------
# Wrapper
# ----------------------------------------------------------------------------
def densenet_pallas(inputs, steps, noise_levels, params, block_n=2048):
    n = inputs.shape[0]
    x = inputs.astype(jnp.float32)                     # [N, 2]
    t = noise_levels[steps].astype(jnp.float32)        # [N]   (XLA glue gather)

    tb = min(_round_up(block_n, 128), _round_up(n, 128))
    n_pad = _round_up(n, tb)
    grid = (n_pad // tb,)

    # feature-major input slab: rows 0-1 = x^T, row 2 = t, rows 3-15 = 0
    xt = jnp.zeros((_SLAB_ROWS, n_pad), jnp.float32)
    xt = xt.at[0:X_DIM, :n].set(x.T)
    xt = xt.at[X_DIM, :n].set(t)

    wm, wf2 = pack_params(params)

    out_fm = pl.pallas_call(
        densenet_kernel,
        out_shape=jax.ShapeDtypeStruct((X_DIM, n_pad), jnp.float32),
        grid=grid,
        in_specs=[
            pl.BlockSpec((_SLAB_ROWS, tb), lambda i: (0, i)),        # batch-tiled
            pl.BlockSpec((_NW, 2 * HIDDEN, HIDDEN), lambda i: (0, 0, 0)),  # resident
            pl.BlockSpec((X_DIM, 2 * HIDDEN), lambda i: (0, 0)),     # resident
        ],
        out_specs=pl.BlockSpec((X_DIM, tb), lambda i: (0, i)),
        compiler_params=pltpu.CompilerParams(
            dimension_semantics=("parallel",)),
    )(xt, wm, wf2)

    # TODO(synk): output aliasing with the input slab is not possible after the
    # layout change; the final [2, N] -> [N, 2] transpose stays in XLA glue.
    return out_fm[:, :n].T


# ----------------------------------------------------------------------------
# Pure-JAX reference (mirrors the PyTorch forward, cond=False path)
# ----------------------------------------------------------------------------
def _dense_ref(h, w, b):
    return jnp.dot(h, w.T, precision=jax.lax.Precision.HIGHEST) + b


def densenet_ref(inputs, steps, noise_levels, params):
    t = noise_levels[steps].astype(jnp.float32)
    freqs = jnp.exp(-math.log(10000.0)
                    * jnp.arange(HALF, dtype=jnp.float32) / HALF)
    args = t[:, None] * freqs[None, :]
    emb = jnp.concatenate([jnp.cos(args), jnp.sin(args)], axis=-1)
    embed = _leaky(_dense_ref(emb, params["wt"], params["bt"]))
    inp = _leaky(_dense_ref(inputs, params["win"], params["bin"]))
    h = inp + embed
    h = _leaky(_dense_ref(h, params["wr1"], params["br1"]))
    h = _dense_ref(h, params["wr2"], params["br2"])
    for i in range(NRESNET):
        res = _dense_ref(h, params["wres"][i], params["bres"][i])
        lay = _leaky(_dense_ref(h, params["wlay"][i], params["blay"][i]))
        h = res + lay
    h = _leaky(_dense_ref(h, params["wf1"], params["bf1"]))
    return _dense_ref(h, params["wf2"], params["bf2"]) + inputs


# ----------------------------------------------------------------------------
# Init (PyTorch nn.Linear-style, weights stored [out, in])
# ----------------------------------------------------------------------------
def init_params(key):
    def lin(k, din, dout):
        kw, kb = jax.random.split(k)
        bound = 1.0 / math.sqrt(din)
        w = jax.random.uniform(kw, (dout, din), jnp.float32, -bound, bound)
        b = jax.random.uniform(kb, (dout,), jnp.float32, -bound, bound)
        return w, b

    ks = jax.random.split(key, 14)
    p = {}
    p["wt"], p["bt"] = lin(ks[0], TIME_EMBED, HIDDEN)
    p["win"], p["bin"] = lin(ks[1], X_DIM, HIDDEN)
    p["wr1"], p["br1"] = lin(ks[2], HIDDEN, HIDDEN)
    p["wr2"], p["br2"] = lin(ks[3], HIDDEN, HIDDEN)
    wres, bres, wlay, blay = [], [], [], []
    for i in range(NRESNET):
        w, b = lin(ks[4 + 2 * i], HIDDEN, HIDDEN); wres.append(w); bres.append(b)
        w, b = lin(ks[5 + 2 * i], HIDDEN, HIDDEN); wlay.append(w); blay.append(b)
    p["wres"] = jnp.stack(wres); p["bres"] = jnp.stack(bres)
    p["wlay"] = jnp.stack(wlay); p["blay"] = jnp.stack(blay)
    p["wf1"], p["bf1"] = lin(ks[12], HIDDEN, 2 * HIDDEN)
    p["wf2"], p["bf2"] = lin(ks[13], 2 * HIDDEN, X_DIM)
    return p


if __name__ == "__main__":
    key = jax.random.PRNGKey(0)
    k_p, k_x, k_s, k_n = jax.random.split(key, 4)

    batch = 300            # not a multiple of 128 -> exercises padding + grid
    num_noise_levels = 50

    params = init_params(k_p)
    inputs = jax.random.normal(k_x, (batch, X_DIM), jnp.float32)
    steps = jax.random.randint(k_s, (batch,), 0, num_noise_levels)
    noise_levels = jax.random.uniform(k_n, (num_noise_levels,), jnp.float32,
                                      1e-3, 1.0)

    out = jax.block_until_ready(
        densenet_pallas(inputs, steps, noise_levels, params, block_n=128))
    ref = jax.block_until_ready(
        densenet_ref(inputs, steps, noise_levels, params))

    assert out.shape == (batch, X_DIM)
    max_err = float(jnp.max(jnp.abs(out - ref)))
    assert jnp.allclose(out, ref, rtol=1e-4, atol=1e-4), max_err

    print("KERNEL_OK")
</pallas_src>

<mosaic_0001>
module attributes {stable_mosaic.version = 11 : i64} {
  func.func @densenet_kernel(%arg0: i32, %arg1: memref<16x128xf32, #tpu.memory_space<vmem>>, %arg2: memref<9x64x32xf32, #tpu.memory_space<vmem>>, %arg3: memref<2x64xf32, #tpu.memory_space<vmem>>, %arg4: memref<2x128xf32, #tpu.memory_space<vmem>>) attributes {dimension_semantics = [#tpu.dimension_semantics<parallel>], iteration_bounds = array<i64: 3>, scalar_prefetch = 0 : i64, scratch_operands = 0 : i64, tpu.core_type = #tpu.core_type<tc>, window_params = [{transform_indices = @transform_0, window_bounds = array<i64: 16, 128>}, {pipeline_mode = #tpu.pipeline_mode<synchronous>, transform_indices = @transform_1, window_bounds = array<i64: 9, 64, 32>}, {pipeline_mode = #tpu.pipeline_mode<synchronous>, transform_indices = @transform_2, window_bounds = array<i64: 2, 64>}, {transform_indices = @transform_3, window_bounds = array<i64: 2, 128>}]} {
    %c0 = arith.constant 0 : index
    %c0_0 = arith.constant 0 : index
    %0 = vector.load %arg1[%c0, %c0_0] : memref<16x128xf32, #tpu.memory_space<vmem>>, vector<16x128xf32>
    %1 = vector.extract_strided_slice %0 {offsets = [0, 0], sizes = [2, 128], strides = [1, 1]} : vector<16x128xf32> to vector<2x128xf32>
    %2 = vector.extract_strided_slice %0 {offsets = [2, 0], sizes = [1, 128], strides = [1, 1]} : vector<16x128xf32> to vector<1x128xf32>
    %3 = tpu.iota {dimensions = array<i32: 0>} : vector<16x128xi32>
    %c8_i32 = arith.constant 8 : i32
    %4 = vector.broadcast %c8_i32 : i32 to vector<16x128xi32>
    %5 = arith.cmpi sge, %3, %4 : vector<16x128xi32>
    %c8_i32_1 = arith.constant 8 : i32
    %6 = vector.broadcast %c8_i32_1 : i32 to vector<16x128xi32>
    %7 = arith.subi %3, %6 : vector<16x128xi32>
    %8 = arith.select %5, %7, %3 : vector<16x128xi1>, vector<16x128xi32>
    %9 = arith.sitofp %8 : vector<16x128xi32> to vector<16x128xf32>
    %cst = arith.constant -1.15129256 : f32
    %10 = vector.broadcast %cst : f32 to vector<16x128xf32>
    %11 = arith.mulf %9, %10 : vector<16x128xf32>
    %12 = math.exp %11 : vector<16x128xf32>
    %13 = vector.broadcast %2 : vector<1x128xf32> to vector<16x128xf32>
    %14 = arith.mulf %12, %13 : vector<16x128xf32>
    %15 = math.sin %14 : vector<16x128xf32>
    %16 = math.cos %14 : vector<16x128xf32>
    %17 = arith.select %5, %15, %16 : vector<16x128xi1>, vector<16x128xf32>
    %18 = tpu.concatenate %0, %17 in 0 : vector<16x128xf32>, vector<16x128xf32> -> vector<32x128xf32>
    %c8 = arith.constant 8 : index
    %c0_2 = arith.constant 0 : index
    %c0_3 = arith.constant 0 : index
    %19 = vector.load %arg2[%c8, %c0_2, %c0_3] : memref<9x64x32xf32, #tpu.memory_space<vmem>>, vector<1x64x32xf32>
    %20 = vector.shape_cast %19 : vector<1x64x32xf32> to vector<64x32xf32>
    %c0_4 = arith.constant 0 : index
    %c0_5 = arith.constant 0 : index
    %c0_6 = arith.constant 0 : index
    %21 = vector.load %arg2[%c0_4, %c0_5, %c0_6] : memref<9x64x32xf32, #tpu.memory_space<vmem>>, vector<1x64x32xf32>
    %22 = vector.shape_cast %21 : vector<1x64x32xf32> to vector<64x32xf32>
    %cst_7 = arith.constant dense<0.000000e+00> : vector<64x128xf32>
    %23 = tpu.matmul %22, %18, %cst_7 {dimension_numbers = #tpu.dot_dimension_numbers<[1], [0], [0], [1], [0, 0, 1, 1], [], []>} : vector<64x32xf32>, vector<32x128xf32>, vector<64x128xf32> -> vector<64x128xf32>
    %24 = vector.extract_strided_slice %20 {offsets = [0, 0], sizes = [64, 1], strides = [1, 1]} : vector<64x32xf32> to vector<64x1xf32>
    %25 = vector.broadcast %24 : vector<64x1xf32> to vector<64x128xf32>
    %26 = arith.addf %23, %25 : vector<64x128xf32>
    %cst_8 = arith.constant 0.000000e+00 : f32
    %27 = vector.broadcast %cst_8 : f32 to vector<64x128xf32>
    %28 = arith.cmpf ogt, %26, %27 : vector<64x128xf32>
    %cst_9 = arith.constant 0.00999999977 : f32
    %29 = vector.broadcast %cst_9 : f32 to vector<64x128xf32>
    %30 = arith.mulf %29, %26 : vector<64x128xf32>
    %31 = arith.select %28, %26, %30 : vector<64x128xi1>, vector<64x128xf32>
    %32 = vector.extract_strided_slice %31 {offsets = [0, 0], sizes = [32, 128], strides = [1, 1]} : vector<64x128xf32> to vector<32x128xf32>
    %33 = vector.extract_strided_slice %31 {offsets = [32, 0], sizes = [32, 128], strides = [1, 1]} : vector<64x128xf32> to vector<32x128xf32>
    %34 = arith.addf %32, %33 : vector<32x128xf32>
    %c1 = arith.constant 1 : index
    %c0_10 = arith.constant 0 : index
    %c0_11 = arith.constant 0 : index
    %35 = vector.load %arg2[%c1, %c0_10, %c0_11] : memref<9x64x32xf32, #tpu.memory_space<vmem>>, vector<1x64x32xf32>
    %36 = vector.shape_cast %35 : vector<1x64x32xf32> to vector<64x32xf32>
    %cst_12 = arith.constant dense<0.000000e+00> : vector<64x128xf32>
    %37 = tpu.matmul %36, %34, %cst_12 {dimension_numbers = #tpu.dot_dimension_numbers<[1], [0], [0], [1], [0, 0, 1, 1], [], []>} : vector<64x32xf32>, vector<32x128xf32>, vector<64x128xf32> -> vector<64x128xf32>
    %38 = vector.extract_strided_slice %20 {offsets = [0, 1], sizes = [64, 1], strides = [1, 1]} : vector<64x32xf32> to vector<64x1xf32>
    %39 = vector.broadcast %38 : vector<64x1xf32> to vector<64x128xf32>
    %40 = arith.addf %37, %39 : vector<64x128xf32>
    %cst_13 = arith.constant 0.000000e+00 : f32
    %41 = vector.broadcast %cst_13 : f32 to vector<64x128xf32>
    %42 = arith.cmpf ogt, %40, %41 : vector<64x128xf32>
    %cst_14 = arith.constant 0.00999999977 : f32
    %43 = vector.broadcast %cst_14 : f32 to vector<64x128xf32>
    %44 = arith.mulf %43, %40 : vector<64x128xf32>
    %45 = arith.select %42, %40, %44 : vector<64x128xi1>, vector<64x128xf32>
    %46 = vector.extract_strided_slice %45 {offsets = [0, 0], sizes = [32, 128], strides = [1, 1]} : vector<64x128xf32> to vector<32x128xf32>
    %c2 = arith.constant 2 : index
    %c0_15 = arith.constant 0 : index
    %c0_16 = arith.constant 0 : index
    %47 = vector.load %arg2[%c2, %c0_15, %c0_16] : memref<9x64x32xf32, #tpu.memory_space<vmem>>, vector<1x64x32xf32>
    %48 = vector.shape_cast %47 : vector<1x64x32xf32> to vector<64x32xf32>
    %cst_17 = arith.constant dense<0.000000e+00> : vector<64x128xf32>
    %49 = tpu.matmul %48, %46, %cst_17 {dimension_numbers = #tpu.dot_dimension_numbers<[1], [0], [0], [1], [0, 0, 1, 1], [], []>} : vector<64x32xf32>, vector<32x128xf32>, vector<64x128xf32> -> vector<64x128xf32>
    %50 = vector.extract_strided_slice %20 {offsets = [0, 2], sizes = [64, 1], strides = [1, 1]} : vector<64x32xf32> to vector<64x1xf32>
    %51 = vector.broadcast %50 : vector<64x1xf32> to vector<64x128xf32>
    %52 = arith.addf %49, %51 : vector<64x128xf32>
    %53 = vector.extract_strided_slice %52 {offsets = [0, 0], sizes = [32, 128], strides = [1, 1]} : vector<64x128xf32> to vector<32x128xf32>
    %c3 = arith.constant 3 : index
    %c0_18 = arith.constant 0 : index
    %c0_19 = arith.constant 0 : index
    %54 = vector.load %arg2[%c3, %c0_18, %c0_19] : memref<9x64x32xf32, #tpu.memory_space<vmem>>, vector<1x64x32xf32>
    %55 = vector.shape_cast %54 : vector<1x64x32xf32> to vector<64x32xf32>
    %cst_20 = arith.constant dense<0.000000e+00> : vector<64x128xf32>
    %56 = tpu.matmul %55, %53, %cst_20 {dimension_numbers = #tpu.dot_dimension_numbers<[1], [0], [0], [1], [0, 0, 1, 1], [], []>} : vector<64x32xf32>, vector<32x128xf32>, vector<64x128xf32> -> vector<64x128xf32>
    %57 = vector.extract_strided_slice %20 {offsets = [0, 3], sizes = [64, 1], strides = [1, 1]} : vector<64x32xf32> to vector<64x1xf32>
    %58 = vector.broadcast %57 : vector<64x1xf32> to vector<64x128xf32>
    %59 = arith.addf %56, %58 : vector<64x128xf32>
    %60 = vector.extract_strided_slice %59 {offsets = [0, 0], sizes = [32, 128], strides = [1, 1]} : vector<64x128xf32> to vector<32x128xf32>
    %61 = vector.extract_strided_slice %59 {offsets = [32, 0], sizes = [32, 128], strides = [1, 1]} : vector<64x128xf32> to vector<32x128xf32>
    %cst_21 = arith.constant 0.000000e+00 : f32
    %62 = vector.broadcast %cst_21 : f32 to vector<32x128xf32>
    %63 = arith.cmpf ogt, %61, %62 : vector<32x128xf32>
    %cst_22 = arith.constant 0.00999999977 : f32
    %64 = vector.broadcast %cst_22 : f32 to vector<32x128xf32>
    %65 = arith.mulf %64, %61 : vector<32x128xf32>
    %66 = arith.select %63, %61, %65 : vector<32x128xi1>, vector<32x128xf32>
    %67 = arith.addf %60, %66 : vector<32x128xf32>
    %c4 = arith.constant 4 : index
    %c0_23 = arith.constant 0 : index
    %c0_24 = arith.constant 0 : index
    %68 = vector.load %arg2[%c4, %c0_23, %c0_24] : memref<9x64x32xf32, #tpu.memory_space<vmem>>, vector<1x64x32xf32>
    %69 = vector.shape_cast %68 : vector<1x64x32xf32> to vector<64x32xf32>
    %cst_25 = arith.constant dense<0.000000e+00> : vector<64x128xf32>
    %70 = tpu.matmul %69, %67, %cst_25 {dimension_numbers = #tpu.dot_dimension_numbers<[1], [0], [0], [1], [0, 0, 1, 1], [], []>} : vector<64x32xf32>, vector<32x128xf32>, vector<64x128xf32> -> vector<64x128xf32>
    %71 = vector.extract_strided_slice %20 {offsets = [0, 4], sizes = [64, 1], strides = [1, 1]} : vector<64x32xf32> to vector<64x1xf32>
    %72 = vector.broadcast %71 : vector<64x1xf32> to vector<64x128xf32>
    %73 = arith.addf %70, %72 : vector<64x128xf32>
    %74 = vector.extract_strided_slice %73 {offsets = [0, 0], sizes = [32, 128], strides = [1, 1]} : vector<64x128xf32> to vector<32x128xf32>
    %75 = vector.extract_strided_slice %73 {offsets = [32, 0], sizes = [32, 128], strides = [1, 1]} : vector<64x128xf32> to vector<32x128xf32>
    %cst_26 = arith.constant 0.000000e+00 : f32
    %76 = vector.broadcast %cst_26 : f32 to vector<32x128xf32>
    %77 = arith.cmpf ogt, %75, %76 : vector<32x128xf32>
    %cst_27 = arith.constant 0.00999999977 : f32
    %78 = vector.broadcast %cst_27 : f32 to vector<32x128xf32>
    %79 = arith.mulf %78, %75 : vector<32x128xf32>
    %80 = arith.select %77, %75, %79 : vector<32x128xi1>, vector<32x128xf32>
    %81 = arith.addf %74, %80 : vector<32x128xf32>
    %c5 = arith.constant 5 : index
    %c0_28 = arith.constant 0 : index
    %c0_29 = arith.constant 0 : index
    %82 = vector.load %arg2[%c5, %c0_28, %c0_29] : memref<9x64x32xf32, #tpu.memory_space<vmem>>, vector<1x64x32xf32>
    %83 = vector.shape_cast %82 : vector<1x64x32xf32> to vector<64x32xf32>
    %cst_30 = arith.constant dense<0.000000e+00> : vector<64x128xf32>
    %84 = tpu.matmul %83, %81, %cst_30 {dimension_numbers = #tpu.dot_dimension_numbers<[1], [0], [0], [1], [0, 0, 1, 1], [], []>} : vector<64x32xf32>, vector<32x128xf32>, vector<64x128xf32> -> vector<64x128xf32>
    %85 = vector.extract_strided_slice %20 {offsets = [0, 5], sizes = [64, 1], strides = [1, 1]} : vector<64x32xf32> to vector<64x1xf32>
    %86 = vector.broadcast %85 : vector<64x1xf32> to vector<64x128xf32>
    %87 = arith.addf %84, %86 : vector<64x128xf32>
    %88 = vector.extract_strided_slice %87 {offsets = [0, 0], sizes = [32, 128], strides = [1, 1]} : vector<64x128xf32> to vector<32x128xf32>
    %89 = vector.extract_strided_slice %87 {offsets = [32, 0], sizes = [32, 128], strides = [1, 1]} : vector<64x128xf32> to vector<32x128xf32>
    %cst_31 = arith.constant 0.000000e+00 : f32
    %90 = vector.broadcast %cst_31 : f32 to vector<32x128xf32>
    %91 = arith.cmpf ogt, %89, %90 : vector<32x128xf32>
    %cst_32 = arith.constant 0.00999999977 : f32
    %92 = vector.broadcast %cst_32 : f32 to vector<32x128xf32>
    %93 = arith.mulf %92, %89 : vector<32x128xf32>
    %94 = arith.select %91, %89, %93 : vector<32x128xi1>, vector<32x128xf32>
    %95 = arith.addf %88, %94 : vector<32x128xf32>
    %c6 = arith.constant 6 : index
    %c0_33 = arith.constant 0 : index
    %c0_34 = arith.constant 0 : index
    %96 = vector.load %arg2[%c6, %c0_33, %c0_34] : memref<9x64x32xf32, #tpu.memory_space<vmem>>, vector<1x64x32xf32>
    %97 = vector.shape_cast %96 : vector<1x64x32xf32> to vector<64x32xf32>
    %cst_35 = arith.constant dense<0.000000e+00> : vector<64x128xf32>
    %98 = tpu.matmul %97, %95, %cst_35 {dimension_numbers = #tpu.dot_dimension_numbers<[1], [0], [0], [1], [0, 0, 1, 1], [], []>} : vector<64x32xf32>, vector<32x128xf32>, vector<64x128xf32> -> vector<64x128xf32>
    %99 = vector.extract_strided_slice %20 {offsets = [0, 6], sizes = [64, 1], strides = [1, 1]} : vector<64x32xf32> to vector<64x1xf32>
    %100 = vector.broadcast %99 : vector<64x1xf32> to vector<64x128xf32>
    %101 = arith.addf %98, %100 : vector<64x128xf32>
    %102 = vector.extract_strided_slice %101 {offsets = [0, 0], sizes = [32, 128], strides = [1, 1]} : vector<64x128xf32> to vector<32x128xf32>
    %103 = vector.extract_strided_slice %101 {offsets = [32, 0], sizes = [32, 128], strides = [1, 1]} : vector<64x128xf32> to vector<32x128xf32>
    %cst_36 = arith.constant 0.000000e+00 : f32
    %104 = vector.broadcast %cst_36 : f32 to vector<32x128xf32>
    %105 = arith.cmpf ogt, %103, %104 : vector<32x128xf32>
    %cst_37 = arith.constant 0.00999999977 : f32
    %106 = vector.broadcast %cst_37 : f32 to vector<32x128xf32>
    %107 = arith.mulf %106, %103 : vector<32x128xf32>
    %108 = arith.select %105, %103, %107 : vector<32x128xi1>, vector<32x128xf32>
    %109 = arith.addf %102, %108 : vector<32x128xf32>
    %c7 = arith.constant 7 : index
    %c0_38 = arith.constant 0 : index
    %c0_39 = arith.constant 0 : index
    %110 = vector.load %arg2[%c7, %c0_38, %c0_39] : memref<9x64x32xf32, #tpu.memory_space<vmem>>, vector<1x64x32xf32>
    %111 = vector.shape_cast %110 : vector<1x64x32xf32> to vector<64x32xf32>
    %cst_40 = arith.constant dense<0.000000e+00> : vector<64x128xf32>
    %112 = tpu.matmul %111, %109, %cst_40 {dimension_numbers = #tpu.dot_dimension_numbers<[1], [0], [0], [1], [0, 0, 1, 1], [], []>} : vector<64x32xf32>, vector<32x128xf32>, vector<64x128xf32> -> vector<64x128xf32>
    %113 = vector.extract_strided_slice %20 {offsets = [0, 7], sizes = [64, 1], strides = [1, 1]} : vector<64x32xf32> to vector<64x1xf32>
    %114 = vector.broadcast %113 : vector<64x1xf32> to vector<64x128xf32>
    %115 = arith.addf %112, %114 : vector<64x128xf32>
    %cst_41 = arith.constant 0.000000e+00 : f32
    %116 = vector.broadcast %cst_41 : f32 to vector<64x128xf32>
    %117 = arith.cmpf ogt, %115, %116 : vector<64x128xf32>
    %cst_42 = arith.constant 0.00999999977 : f32
    %118 = vector.broadcast %cst_42 : f32 to vector<64x128xf32>
    %119 = arith.mulf %118, %115 : vector<64x128xf32>
    %120 = arith.select %117, %115, %119 : vector<64x128xi1>, vector<64x128xf32>
    %c0_43 = arith.constant 0 : index
    %c0_44 = arith.constant 0 : index
    %121 = vector.load %arg3[%c0_43, %c0_44] : memref<2x64xf32, #tpu.memory_space<vmem>>, vector<2x64xf32>
    %cst_45 = arith.constant dense<0.000000e+00> : vector<2x128xf32>
    %122 = tpu.matmul %121, %120, %cst_45 {dimension_numbers = #tpu.dot_dimension_numbers<[1], [0], [0], [1], [0, 0, 1, 1], [], []>} : vector<2x64xf32>, vector<64x128xf32>, vector<2x128xf32> -> vector<2x128xf32>
    %123 = vector.extract_strided_slice %20 {offsets = [0, 8], sizes = [2, 1], strides = [1, 1]} : vector<64x32xf32> to vector<2x1xf32>
    %124 = vector.broadcast %123 : vector<2x1xf32> to vector<2x128xf32>
    %125 = arith.addf %122, %124 : vector<2x128xf32>
    %126 = arith.addf %125, %1 : vector<2x128xf32>
    %c0_46 = arith.constant 0 : index
    %c0_47 = arith.constant 0 : index
    %127 = vector.load %arg4[%c0_46, %c0_47] : memref<2x128xf32, #tpu.memory_space<vmem>>, vector<2x128xf32>
    tpu.vector_store %arg4[%c0_46, %c0_47], %126 {strides = array<i32>} : memref<2x128xf32, #tpu.memory_space<vmem>>, vector<2x128xf32>,
    return
  }
  func.func @transform_0(%arg0: i32) -> (i32, i32) {
    %c0_i32 = arith.constant 0 : i32
    %c0_i32_0 = arith.constant 0 : i32
    return %c0_i32, %arg0 : i32, i32
  }
  func.func @transform_1(%arg0: i32) -> (i32, i32, i32) {
    %c0_i32 = arith.constant 0 : i32
    %c0_i32_0 = arith.constant 0 : i32
    %c0_i32_1 = arith.constant 0 : i32
    %c0_i32_2 = arith.constant 0 : i32
    return %c0_i32, %c0_i32_0, %c0_i32_1 : i32, i32, i32
  }
  func.func @transform_2(%arg0: i32) -> (i32, i32) {
    %c0_i32 = arith.constant 0 : i32
    %c0_i32_0 = arith.constant 0 : i32
    %c0_i32_1 = arith.constant 0 : i32
    return %c0_i32, %c0_i32_0 : i32, i32
  }
  func.func @transform_3(%arg0: i32) -> (i32, i32) {
    %c0_i32 = arith.constant 0 : i32
    %c0_i32_0 = arith.constant 0 : i32
    return %c0_i32, %arg0 : i32, i32
  }
}

</mosaic_0001>

<llo_original>
// kernel: tpu_custom_call.1
$region0: #{tpu_custom_call.1}
  #allocation0 [shape = 'u32[]', space=smem, size = 0x4, offset = 0x4, fixed_abs, tag = 'smem constant byte address 0x4 - core index']
  #allocation1 [shape = 'u32[72,128]{1,0:T(1,128)}', space=vmem, size = 0x9000, scoped, tag = 'internal scratch']
  %s0 = inlined_call_operand.vmem [shape: f32[16,384], index: 0, kind: input, shape index: {}]
  %s1 = inlined_call_operand.vmem [shape: f32[9,64,32], index: 1, kind: input, shape index: {}]
  %s2 = inlined_call_operand.vmem [shape: f32[2,64], index: 2, kind: input, shape index: {}]
  %s3 = inlined_call_operand.hbm [shape: f32[2,384], index: 3, kind: output, shape index: {}]
  %s4 = sld [smem:[#allocation0]]
  $region83: #{tpu_custom_call.1} parent=0
    _
  %s6 = ssub.s32 1, %s4
  %s7 = scalar_select 0, %s6, %s4
  $region1: #{tpu_custom_call.1} parent=0
    #allocation2 [shape = 'u8[16384]{0}', space=vmem, size = 0x4000, scoped, tag = 'input window, operand 0']
    #allocation3 [shape = 'u8[2048]{0}', space=vmem, size = 0x800, scoped, tag = 'output window, operand 0']
    #allocation4 [shape = 's32[2]{0}', space=sflag, size = 0x8, scoped, tag = 'scoped memory for tpu_custom_call.1']
    %8 = vsyncpa [#allocation4], 0
    %s9 = scalar_lea.sflag [#allocation4], 1
    %10 = vsyncpa %s9, 0
    loop: start=0, step=1, limit=5
    $region2: #{tpu_custom_call.1} parent=1 // loop_pre_header
      _
    $region3: #{tpu_custom_call.1} parent=1 // loop_header
      %s12 = sphi 0, %s16
      %p13 = scmp.ge.s32.totalorder %s12, 5
      %s22 = sphi 0, %s24
      %s25 = sphi 0, %s22
      %s26 = sphi 0, %s25
      %s42 = sphi 0, %s26
      %s46 = sphi 0, %s46
      %s48 = sphi 0, %s46
      %s49 = sphi 0, %s48
      %s63 = sphi 0, %s49
      %s67 = sphi 0, %s67
      %s69 = sphi 0, %s67
      %s70 = sphi 0, %s69
      %s84 = sphi 0, %s70
      %s90 = sphi 0, %s92
      %s93 = sphi 0, %s90
      %s94 = sphi 0, %s93
      %s110 = sphi 0, %s94
    $region4: #{tpu_custom_call.1} parent=1 // loop_header_branch
      %15 = sbr.rel (%p13) target = $region8
    $region5: #{tpu_custom_call.1} parent=1 // loop_body
      %s17 = ssub.s32 %s12, 1
      %s18 = ssub.s32 %s12, 2
      %s19 = sadd.s32 %s12, 1
      %s20 = ssub.s32 %s12, %s19
      %p21 = scmp.eq.s32.totalorder %s20, 0
      %s23 = sadd.s32 %s22, 1
      %s24 = scalar_select %p21, %s22, %s23
      %p27 = pneg %p21
      %p28 = scmp.eq.s32.totalorder %s12, 2
      %p29 = por %p27, %p28
      %p30 = scmp.ne.s32.totalorder %s22, %s25
      %p31 = scmp.eq.s32.totalorder %s12, 0
      %p32 = por %p30, %p31
      %p33 = scmp.ne.s32.totalorder %s22, %s25
      %p34 = scmp.eq.s32.totalorder %s17, 2
      %p35 = por %p33, %p34
      %p36 = scmp.ne.s32.totalorder %s25, %s26
      %p37 = scmp.eq.s32.totalorder %s17, 0
      %p38 = por %p36, %p37
      %p39 = scmp.ne.s32.totalorder %s25, %s26
      %p40 = scmp.eq.s32.totalorder %s18, 2
      %p41 = por %p39, %p40
      %p43 = scmp.ne.s32.totalorder %s26, %s42
      %p44 = scmp.eq.s32.totalorder %s18, 0
      %p45 = por %p43, %p44
      %s47 = sadd.s32 %s46, 1
      %p50 = scmp.eq.s32.totalorder %s12, 2
      %p51 = scmp.ne.s32.totalorder %s46, %s48
      %p52 = scmp.eq.s32.totalorder %s12, 0
      %p53 = por %p51, %p52
      %p54 = scmp.ne.s32.totalorder %s46, %s48
      %p55 = scmp.eq.s32.totalorder %s17, 2
      %p56 = por %p54, %p55
      %p57 = scmp.ne.s32.totalorder %s48, %s49
      %p58 = scmp.eq.s32.totalorder %s17, 0
      %p59 = por %p57, %p58
      %p60 = scmp.ne.s32.totalorder %s48, %s49
      %p61 = scmp.eq.s32.totalorder %s18, 2
      %p62 = por %p60, %p61
      %p64 = scmp.ne.s32.totalorder %s49, %s63
      %p65 = scmp.eq.s32.totalorder %s18, 0
      %p66 = por %p64, %p65
      %s68 = sadd.s32 %s67, 1
      %p71 = scmp.eq.s32.totalorder %s12, 2
      %p72 = scmp.ne.s32.totalorder %s67, %s69
      %p73 = scmp.eq.s32.totalorder %s12, 0
      %p74 = por %p72, %p73
      %p75 = scmp.ne.s32.totalorder %s67, %s69
      %p76 = scmp.eq.s32.totalorder %s17, 2
      %p77 = por %p75, %p76
      %p78 = scmp.ne.s32.totalorder %s69, %s70
      %p79 = scmp.eq.s32.totalorder %s17, 0
      %p80 = por %p78, %p79
      %p81 = scmp.ne.s32.totalorder %s69, %s70
      %p82 = scmp.eq.s32.totalorder %s18, 2
      %p83 = por %p81, %p82
      %p85 = scmp.ne.s32.totalorder %s70, %s84
      %p86 = scmp.eq.s32.totalorder %s18, 0
      %p87 = por %p85, %p86
      %s88 = ssub.s32 %s12, %s19
      %p89 = scmp.eq.s32.totalorder %s88, 0
      %s91 = sadd.s32 %s90, 1
      %s92 = scalar_select %p89, %s90, %s91
      %p95 = pneg %p89
      %p96 = scmp.eq.s32.totalorder %s12, 2
      %p97 = por %p95, %p96
      %p98 = scmp.ne.s32.totalorder %s90, %s93
      %p99 = scmp.eq.s32.totalorder %s12, 0
      %p100 = por %p98, %p99
      %p101 = scmp.ne.s32.totalorder %s90, %s93
      %p102 = scmp.eq.s32.totalorder %s17, 2
      %p103 = por %p101, %p102
      %p104 = scmp.ne.s32.totalorder %s93, %s94
      %p105 = scmp.eq.s32.totalorder %s17, 0
      %p106 = por %p104, %p105
      %p107 = scmp.ne.s32.totalorder %s93, %s94
      %p108 = scmp.eq.s32.totalorder %s18, 2
      %p109 = por %p107, %p108
      %p111 = scmp.ne.s32.totalorder %s94, %s110
      %p112 = scmp.eq.s32.totalorder %s18, 0
      %p113 = por %p111, %p112
      %p114 = scmp.le.s32.totalorder 1, %s12
      %p115 = scmp.lt.s32.totalorder %s12, 4
      %p116 = pnand %p114, %p115
      %p117 = pneg %p116
      // Predicated region
      $region9: #{tpu_custom_call.1} parent=5 // pred_check
        _
      $region10: #{tpu_custom_call.1} parent=5 // pred_check_branch
        %119 = sbr.rel (%p116) target = $region12
      $region11: #{tpu_custom_call.1} parent=5 // pred_region
        %s120 = ssub.s32 %s12, 1
        // Predicated region
        $region13: #{tpu_custom_call.1} parent=11 // pred_check
          %p121 = pneg %p59
        $region14: #{tpu_custom_call.1} parent=11 // pred_check_branch
          %123 = sbr.rel (%p121) target = $region16
        $region15: #{tpu_custom_call.1} parent=11 // pred_region
          _
        $region16: #{tpu_custom_call.1} parent=11 // pred_fallthru
          _
        // Predicated region
        $region17: #{tpu_custom_call.1} parent=11 // pred_check
          %p124 = pneg %p80
        $region18: #{tpu_custom_call.1} parent=11 // pred_check_branch
          %126 = sbr.rel (%p124) target = $region20
        $region19: #{tpu_custom_call.1} parent=11 // pred_region
          _
        $region20: #{tpu_custom_call.1} parent=11 // pred_fallthru
          _
      $region12: #{tpu_custom_call.1} parent=5 // pred_fallthru
        _
      %p127 = scmp.lt.s32.totalorder %s12, 3
      // Predicated region
      $region21: #{tpu_custom_call.1} parent=5 // pred_check
        %p128 = pneg %p127
      $region22: #{tpu_custom_call.1} parent=5 // pred_check_branch
        %130 = sbr.rel (%p128) target = $region24
      $region23: #{tpu_custom_call.1} parent=5 // pred_region
        // Predicated region
        $region25: #{tpu_custom_call.1} parent=23 // pred_check
          %p131 = pneg %p32
        $region26: #{tpu_custom_call.1} parent=23 // pred_check_branch
          %133 = sbr.rel (%p131) target = $region28
        $region27: #{tpu_custom_call.1} parent=23 // pred_region
          %s134 = sand.u32 %s22, 1
          %s135 = sand.u32 %s22, 1
          %s136 = smul.addr %s135, 16
          %s137 = scalar_lea.vmem [#allocation2], %s136
          %s138 = smul.addr %s12, 8
          %s139 = scalar_lea.vmem %s0, %s138
          // Predicated region
          $region29: #{tpu_custom_call.1} parent=27 // pred_check
            _
          $region30: #{tpu_custom_call.1} parent=27 // pred_check_branch
            %141 = sbr.rel (0) target = $region32
          $region31: #{tpu_custom_call.1} parent=27 // pred_region
            // Predicated region
            $region33: #{tpu_custom_call.1} parent=31 // pred_check
              _
            $region34: #{tpu_custom_call.1} parent=31 // pred_check_branch
              %143 = sbr.rel (0) target = $region36
            $region35: #{tpu_custom_call.1} parent=31 // pred_region
              // Predicated region
              $region48: #{tpu_custom_call.1} parent=35 // pred_check
                _
              $region49: #{tpu_custom_call.1} parent=35 // pred_check_branch
                %161 = sbr.rel (0) target = $region51
              $region50: #{tpu_custom_call.1} parent=35 // pred_region
                loop: start=0, step=1, limit=1
                $region52: #{tpu_custom_call.1} parent=50 // loop_pre_header
                  _
                $region53: #{tpu_custom_call.1} parent=50 // loop_header
                  %s163 = sphi 0, %s167
                  %p164 = scmp.ge.s32.totalorder %s163, 1
                  %s168 = sphi %s139, %s139
                  %s169 = sphi %s137, %s137
                $region54: #{tpu_custom_call.1} parent=50 // loop_header_branch
                  %166 = sbr.rel (%p164) target = $region58
                $region55: #{tpu_custom_call.1} parent=50 // loop_body
                  %v170 = vld [vmem:[%s168] sm:$0xff]
                  %171 = vst [vmem:[%s169] sm:$0xff] %v170
                  %v172 = vld [vmem:[%s168 + $0x18] sm:$0xff]
                  %173 = vst [vmem:[%s169 + $0x8] sm:$0xff] %v172
                $region56: #{tpu_custom_call.1} parent=50 // loop_footer
                  %s167 = sadd.s32 1, %s163
                $region57: #{tpu_custom_call.1} parent=50 // loop_footer_branch
                  %162 = sbr.rel target = $region53
                $region58: #{tpu_custom_call.1} parent=50 // loop_exit
                  _
              $region51: #{tpu_custom_call.1} parent=35 // pred_fallthru
                _
              // Predicated region
              $region59: #{tpu_custom_call.1} parent=35 // pred_check
                _
              $region60: #{tpu_custom_call.1} parent=35 // pred_check_branch
                %175 = sbr.rel target = $region62
              $region61: #{tpu_custom_call.1} parent=35 // pred_region
                _
              $region62: #{tpu_custom_call.1} parent=35 // pred_fallthru
                _
            $region36: #{tpu_custom_call.1} parent=31 // pred_fallthru
              _
            // Predicated region
            $region37: #{tpu_custom_call.1} parent=31 // pred_check
              _
            $region38: #{tpu_custom_call.1} parent=31 // pred_check_branch
              %145 = sbr.rel target = $region40
            $region39: #{tpu_custom_call.1} parent=31 // pred_region
              %s147 = ssub.s32 256, 1
              loop: start=0, step=1, limit=1
              $region41: #{tpu_custom_call.1} parent=39 // loop_pre_header
                _
              $region42: #{tpu_custom_call.1} parent=39 // loop_header
                %s149 = sphi 0, %s153
                %p150 = scmp.ge.s32.totalorder %s149, 1
                %s154 = sphi %s139, %s139
                %s155 = sphi %s137, %s137
              $region43: #{tpu_custom_call.1} parent=39 // loop_header_branch
                %152 = sbr.rel (%p150) target = $region47
              $region44: #{tpu_custom_call.1} parent=39 // loop_body
                %v156 = vld [vmem:[%s154] sm:%s147]
                %157 = vst [vmem:[%s155] sm:%s147] %v156
                %v158 = vld [vmem:[%s154 + $0x18] sm:%s147]
                %159 = vst [vmem:[%s155 + $0x8] sm:%s147] %v158
              $region45: #{tpu_custom_call.1} parent=39 // loop_footer
                %s153 = sadd.s32 1, %s149
              $region46: #{tpu_custom_call.1} parent=39 // loop_footer_branch
                %148 = sbr.rel target = $region42
              $region47: #{tpu_custom_call.1} parent=39 // loop_exit
                _
            $region40: #{tpu_custom_call.1} parent=31 // pred_fallthru
              _
          $region32: #{tpu_custom_call.1} parent=27 // pred_fallthru
            _
          %176 = vnop
        $region28: #{tpu_custom_call.1} parent=23 // pred_fallthru
          _
      $region24: #{tpu_custom_call.1} parent=5 // pred_fallthru
        _
      %p177 = scmp.le.s32.totalorder 1, %s12
      %p178 = scmp.lt.s32.totalorder %s12, 4
      %p179 = pnand %p177, %p178
      %p180 = pneg %p179
      // Predicated region
      $region63: #{tpu_custom_call.1} parent=5 // pred_check
        _
      $region64: #{tpu_custom_call.1} parent=5 // pred_check_branch
        %182 = sbr.rel (%p179) target = $region66
      $region65: #{tpu_custom_call.1} parent=5 // pred_region
        %s183 = ssub.s32 %s12, 1
        %s184 = sand.u32 %s25, 1
        %s185 = sand.u32 %s25, 1
        %s186 = smul.addr %s185, 16
        %s187 = scalar_lea.vmem [#allocation2], %s186
        // Predicated region
        $region67: #{tpu_custom_call.1} parent=65 // pred_check
          %p188 = pneg %p38
        $region68: #{tpu_custom_call.1} parent=65 // pred_check_branch
          %190 = sbr.rel (%p188) target = $region70
        $region69: #{tpu_custom_call.1} parent=65 // pred_region
          _
        $region70: #{tpu_custom_call.1} parent=65 // pred_fallthru
          _
        %s191 = sand.u32 %s25, 1
        %s192 = sand.u32 %s25, 1
        %s193 = smul.addr %s192, 16
        %s194 = scalar_lea.vmem [#allocation2], %s193
        %p195 = pneg %p38
        %p196 = pneg %p35
        %p197 = pneg %p59
        %p198 = pneg %p56
        %p199 = pneg %p80
        %p200 = pneg %p77
        %p201 = pneg %p106
        %p202 = pneg %p103
        %s203 = sand.u32 %s93, 1
        %s204 = scalar_lea.sflag [#allocation4], %s203
        %s205 = sand.u32 %s93, 1
        %s206 = smul.addr %s205, 2
        %s207 = scalar_lea.vmem [#allocation3], %s206
        %v208 = vld [vmem:[%s187] sm:$0xff]
        %v209 = vld [vmem:[%s187 + $0x8] sm:$0xff]
        %v210 = vlaneseq
        %v211 = vshrl.u32 %v210, 7
        %v212 = vadd.s32 %v211, 8
        %vm213 = vcmp.ge.s32.totalorder %v211, 8
        %vm214 = vcmp.ge.s32.totalorder %v212, 8
        %v215 = vsub.s32 %v211, 8
        %v216 = vsel %vm213, %v215, %v211
        %v217 = vsel %vm214, %v211, %v212
        %v218 = vcvt.s32.f32 %v216
        %v219 = vcvt.s32.f32 %v217
        %v220 = vmul.f32 %v218, -1.1512926
        %v221 = vmul.f32 %v219, -1.1512926
        %v222 = vmul.f32 %v220, 1.442695
        %v223 = vpow.pop %v222
        %v224 = vmul.f32 %v221, 1.442695
        %v225 = vpow.pop %v224
        %v226 = vperm.slane %v208, 2
        %v227 = vmul.f32 %v223, %v226
        %v228 = vmul.f32 %v225, %v226
        %v229 = vand.u32 2147483647, %v227
        %vm230 = vcmp.le.f32.partialorder %v229, 0.7853982
        %vm231 = vcmp.lt.s32.totalorder %v227, 0
        %v232 = vand.u32 %v227, 2139095040
        %v233 = vshrl.u32 %v232, 23
        %v234 = vsub.s32 %v233, 127
        %v235 = vand.u32 2147483647, %v227
        %v236 = vand.u32 %v235, 8388607
        %v237 = vor.u32 %v236, 8388608
        %v238 = vsub.s32 0, %v237
        %v239 = vadd.s32 %v234, 1
        %vm240 = vcmp.gt.s32.totalorder %v239, 0
        %v241 = vsel %vm240, %v239, 0
        %v242 = vshrl.u32 %v241, 5
        %v243 = vand.u32 %v241, 31
        %v244 = vsub.s32 32, %v243
        %v245 = vshrl.u32 683565275, %v244
        %v246 = vshll.u32 683565275, %v243
        %v247 = vshrl.u32 2475754826, %v244
        %v248 = vor.u32 %v246, %v247
        %v249 = vshll.u32 2475754826, %v243
        %v250 = vshrl.u32 2131351028, %v244
        %v251 = vor.u32 %v249, %v250
        %v252 = vshll.u32 2131351028, %v243
        %v253 = vshrl.u32 2102212464, %v244
        %v254 = vor.u32 %v252, %v253
        %v255 = vshll.u32 2102212464, %v243
        %v256 = vshrl.u32 920167782, %v244
        %v257 = vor.u32 %v255, %v256
        %v258 = vshll.u32 920167782, %v243
        %v259 = vshrl.u32 1326507024, %v244
        %v260 = vor.u32 %v258, %v259
        %vm261 = vcmp.lt.s32.totalorder %v242, 1
        %vm262 = vcmp.lt.s32.totalorder %v242, 2
        %vm263 = vcmp.lt.s32.totalorder %v242, 3
        %vm264 = vcmp.lt.s32.totalorder %v242, 4
        %v265 = vsel %vm261, %v245, %v248
        %v266 = vsel %vm264, %v254, 2102212464
        %v267 = vsel %vm263, %v251, %v266
        %v268 = vsel %vm262, %v265, %v267
        %v269 = vsel %vm261, %v248, %v251
        %v270 = vsel %vm264, %v257, 920167782
        %v271 = vsel %vm263, %v254, %v270
        %v272 = vsel %vm262, %v269, %v271
        %v273 = vsel %vm261, %v251, %v254
        %v274 = vsel %vm264, %v260, 1326507024
        %v275 = vsel %vm263, %v257, %v274
        %v276 = vsel %vm262, %v273, %v275
        %v277 = vshll.u32 %v237, 8
        %v278 = vand.u32 %v277, 65535
        %v279 = vshrl.u32 %v277, 16
        %v280 = vand.u32 %v276, 65535
        %v281 = vshrl.u32 %v276, 16
        %v282 = vmul.u32 %v278, %v280
        %v283 = vmul.u32 %v278, %v281
        %v284 = vmul.u32 %v279, %v280
        %v285 = vmul.u32 %v279, %v281
        %v286 = vshll.u32 %v283, 16
        %v287 = vshrl.u32 %v283, 16
        %v288 = vshll.u32 %v284, 16
        %v289 = vshrl.u32 %v284, 16
        %vm290 = vc.u32 %v282, %v286
        %v291 = vsel %vm290, 1, 0
        %v292 = vadd.s32 %v282, %v286
        %v293 = vadd.s32 %v285, %v291
        %vm294 = vc.u32 %v292, %v288
        %v295 = vsel %vm294, 1, 0
        %v296 = vadd.s32 %v292, %v288
        %v297 = vadd.s32 %v293, %v295
        %v298 = vadd.s32 %v297, %v287
        %v299 = vadd.s32 %v298, %v289
        %v300 = vand.u32 %v277, 65535
        %v301 = vshrl.u32 %v277, 16
        %v302 = vand.u32 %v272, 65535
        %v303 = vshrl.u32 %v272, 16
        %v304 = vmul.u32 %v300, %v302
        %v305 = vmul.u32 %v300, %v303
        %v306 = vmul.u32 %v301, %v302
        %v307 = vmul.u32 %v301, %v303
        %v308 = vshll.u32 %v305, 16
        %v309 = vshrl.u32 %v305, 16
        %v310 = vshll.u32 %v306, 16
        %v311 = vshrl.u32 %v306, 16
        %vm312 = vc.u32 %v304, %v308
        %v313 = vsel %vm312, 1, 0
        %v314 = vadd.s32 %v304, %v308
        %v315 = vadd.s32 %v307, %v313
        %vm316 = vc.u32 %v314, %v310
        %v317 = vsel %vm316, 1, 0
        %v318 = vadd.s32 %v314, %v310
        %v319 = vadd.s32 %v315, %v317
        %v320 = vadd.s32 %v319, %v309
        %v321 = vadd.s32 %v320, %v311
        %v322 = vmul.u32 %v277, %v268
        %v323 = vadd.s32 %v299, %v318
        %vm324 = vc.u32 %v299, %v318
        %v325 = vadd.s32 %v321, 1
        %v326 = vsel %vm324, %v325, %v321
        %v327 = vadd.s32 %v322, %v326
        %v328 = vadd.s32 %v327, 536870912
        %v329 = vshrl.u32 %v328, 30
        %v330 = vshll.u32 %v329, 30
        %v331 = vsub.s32 %v327, %v330
        %vm332 = vcmp.lt.s32.totalorder %v331, 0
        %v333 = vsub.s32 0, %v331
        %v334 = vsel %vm332, %v333, %v331
        %v335 = vclz %v334
        %v336 = vsub.s32 %v335, 2
        %vm337 = vcmp.gt.s32.totalorder 0, %v336
        %v338 = vsel %vm337, 0, %v336
        %v339 = vsub.s32 32, %v338
        %v340 = vshll.u32 %v331, %v338
        %v341 = vshrl.u32 %v323, %v339
        %v342 = vor.u32 %v340, %v341
        %v343 = vsub.s32 4294967266, %v338
        %v344 = vadd.s32 %v343, 127
        %v345 = vshll.u32 %v344, 23
        %v346 = vor.u32 4788187, %v345
        %v347 = vand.u32 2147483647, %v346
        %v349 = vcvt.s32.f32 %v342
        %v350 = vmul.f32 %v349, %v347
        %v351 = vxor.u32 %v350, 2147483648
        %v352 = vsel %vm231, %v351, %v350
        %v353 = vsub.s32 4, %v329
        %v354 = vsel %vm231, %v353, %v329
        %v355 = vsel %vm230, %v227, %v352
        %v356 = vsel %vm230, 0, %v354
        %v357 = vmul.f32 %v355, %v355
        %v358 = vmul.f32 %v357, -0.001358992
        %v359 = vadd.f32 %v358, 0.041655596
        %v360 = vmul.f32 %v357, %v359
        %v361 = vadd.f32 %v360, -0.4999988
        %v362 = vmul.f32 %v357, %v361
        %v363 = vadd.f32 1.0, %v362
        %v364 = vmul.f32 %v355, %v355
        %v365 = vmul.f32 %v364, -0.00019511016
        %v366 = vadd.f32 %v365, 0.008332121
        %v367 = vmul.f32 %v364, %v366
        %v368 = vadd.f32 %v367, -0.16666654
        %v369 = vmul.f32 %v364, %v368
        %v370 = vadd.f32 %v369, 1.0
        %v371 = vmul.f32 %v370, %v355
        %vm372 = vweird.f32 %v227
        %v373 = vadd.s32 %v356, 3
        %v374 = vand.u32 %v373, 3
        %vm375 = vcmp.lt.s32.totalorder %v374, 2
        %vm376 = vcmp.eq.s32.totalorder %v374, 0
        %v377 = vxor.u32 %v371, 2147483648
        %v378 = vsel %vm376, %v363, %v377
        %vm379 = vcmp.eq.s32.totalorder %v374, 2
        %v380 = vxor.u32 %v363, 2147483648
        %v381 = vsel %vm379, %v380, %v371
        %v382 = vsel %vm375, %v378, %v381
        %v383 = vsel %vm372, nan, %v382
        %v384 = vand.u32 2147483647, %v228
        %vm385 = vcmp.le.f32.partialorder %v384, 0.7853982
        %vm386 = vcmp.lt.s32.totalorder %v228, 0
        %v387 = vand.u32 %v228, 2139095040
        %v388 = vshrl.u32 %v387, 23
        %v389 = vsub.s32 %v388, 127
        %v390 = vand.u32 2147483647, %v228
        %v391 = vand.u32 %v390, 8388607
        %v392 = vor.u32 %v391, 8388608
        %v393 = vsub.s32 0, %v392
        %v394 = vadd.s32 %v389, 1
        %vm395 = vcmp.gt.s32.totalorder %v394, 0
        %v396 = vsel %vm395, %v394, 0
        %v397 = vshrl.u32 %v396, 5
        %v398 = vand.u32 %v396, 31
        %v399 = vsub.s32 32, %v398
        %v400 = vshrl.u32 683565275, %v399
        %v401 = vshll.u32 683565275, %v398
        %v402 = vshrl.u32 2475754826, %v399
        %v403 = vor.u32 %v401, %v402
        %v404 = vshll.u32 2475754826, %v398
        %v405 = vshrl.u32 2131351028, %v399
        %v406 = vor.u32 %v404, %v405
        %v407 = vshll.u32 2131351028, %v398
        %v408 = vshrl.u32 2102212464, %v399
        %v409 = vor.u32 %v407, %v408
        %v410 = vshll.u32 2102212464, %v398
        %v411 = vshrl.u32 920167782, %v399
        %v412 = vor.u32 %v410, %v411
        %v413 = vshll.u32 920167782, %v398
        %v414 = vshrl.u32 1326507024, %v399
        %v415 = vor.u32 %v413, %v414
        %vm416 = vcmp.lt.s32.totalorder %v397, 1
        %vm417 = vcmp.lt.s32.totalorder %v397, 2
        %vm418 = vcmp.lt.s32.totalorder %v397, 3
        %vm419 = vcmp.lt.s32.totalorder %v397, 4
        %v420 = vsel %vm416, %v400, %v403
        %v421 = vsel %vm419, %v409, 2102212464
        %v422 = vsel %vm418, %v406, %v421
        %v423 = vsel %vm417, %v420, %v422
        %v424 = vsel %vm416, %v403, %v406
        %v425 = vsel %vm419, %v412, 920167782
        %v426 = vsel %vm418, %v409, %v425
        %v427 = vsel %vm417, %v424, %v426
        %v428 = vsel %vm416, %v406, %v409
        %v429 = vsel %vm419, %v415, 1326507024
        %v430 = vsel %vm418, %v412, %v429
        %v431 = vsel %vm417, %v428, %v430
        %v432 = vshll.u32 %v392, 8
        %v433 = vand.u32 %v432, 65535
        %v434 = vshrl.u32 %v432, 16
        %v435 = vand.u32 %v431, 65535
        %v436 = vshrl.u32 %v431, 16
        %v437 = vmul.u32 %v433, %v435
        %v438 = vmul.u32 %v433, %v436
        %v439 = vmul.u32 %v434, %v435
        %v440 = vmul.u32 %v434, %v436
        %v441 = vshll.u32 %v438, 16
        %v442 = vshrl.u32 %v438, 16
        %v443 = vshll.u32 %v439, 16
        %v444 = vshrl.u32 %v439, 16
        %vm445 = vc.u32 %v437, %v441
        %v446 = vsel %vm445, 1, 0
        %v447 = vadd.s32 %v437, %v441
        %v448 = vadd.s32 %v440, %v446
        %vm449 = vc.u32 %v447, %v443
        %v450 = vsel %vm449, 1, 0
        %v451 = vadd.s32 %v447, %v443
        %v452 = vadd.s32 %v448, %v450
        %v453 = vadd.s32 %v452, %v442
        %v454 = vadd.s32 %v453, %v444
        %v455 = vand.u32 %v432, 65535
        %v456 = vshrl.u32 %v432, 16
        %v457 = vand.u32 %v427, 65535
        %v458 = vshrl.u32 %v427, 16
        %v459 = vmul.u32 %v455, %v457
        %v460 = vmul.u32 %v455, %v458
        %v461 = vmul.u32 %v456, %v457
        %v462 = vmul.u32 %v456, %v458
        %v463 = vshll.u32 %v460, 16
        %v464 = vshrl.u32 %v460, 16
        %v465 = vshll.u32 %v461, 16
        %v466 = vshrl.u32 %v461, 16
        %vm467 = vc.u32 %v459, %v463
        %v468 = vsel %vm467, 1, 0
        %v469 = vadd.s32 %v459, %v463
        %v470 = vadd.s32 %v462, %v468
        %vm471 = vc.u32 %v469, %v465
        %v472 = vsel %vm471, 1, 0
        %v473 = vadd.s32 %v469, %v465
        %v474 = vadd.s32 %v470, %v472
        %v475 = vadd.s32 %v474, %v464
        %v476 = vadd.s32 %v475, %v466
        %v477 = vmul.u32 %v432, %v423
        %v478 = vadd.s32 %v454, %v473
        %vm479 = vc.u32 %v454, %v473
        %v480 = vadd.s32 %v476, 1
        %v481 = vsel %vm479, %v480, %v476
        %v482 = vadd.s32 %v477, %v481
        %v483 = vadd.s32 %v482, 536870912
        %v484 = vshrl.u32 %v483, 30
        %v485 = vshll.u32 %v484, 30
        %v486 = vsub.s32 %v482, %v485
        %vm487 = vcmp.lt.s32.totalorder %v486, 0
        %v488 = vsub.s32 0, %v486
        %v489 = vsel %vm487, %v488, %v486
        %v490 = vclz %v489
        %v491 = vsub.s32 %v490, 2
        %vm492 = vcmp.gt.s32.totalorder 0, %v491
        %v493 = vsel %vm492, 0, %v491
        %v494 = vsub.s32 32, %v493
        %v495 = vshll.u32 %v486, %v493
        %v496 = vshrl.u32 %v478, %v494
        %v497 = vor.u32 %v495, %v496
        %v498 = vsub.s32 4294967266, %v493
        %v499 = vadd.s32 %v498, 127
        %v500 = vshll.u32 %v499, 23
        %v501 = vor.u32 4788187, %v500
        %v502 = vand.u32 2147483647, %v501
        %v504 = vcvt.s32.f32 %v497
        %v505 = vmul.f32 %v504, %v502
        %v506 = vxor.u32 %v505, 2147483648
        %v507 = vsel %vm386, %v506, %v505
        %v508 = vsub.s32 4, %v484
        %v509 = vsel %vm386, %v508, %v484
        %v510 = vsel %vm385, %v228, %v507
        %v511 = vsel %vm385, 0, %v509
        %v512 = vmul.f32 %v510, %v510
        %v513 = vmul.f32 %v512, -0.001358992
        %v514 = vadd.f32 %v513, 0.041655596
        %v515 = vmul.f32 %v512, %v514
        %v516 = vadd.f32 %v515, -0.4999988
        %v517 = vmul.f32 %v512, %v516
        %v518 = vadd.f32 1.0, %v517
        %v519 = vmul.f32 %v510, %v510
        %v520 = vmul.f32 %v519, -0.00019511016
        %v521 = vadd.f32 %v520, 0.008332121
        %v522 = vmul.f32 %v519, %v521
        %v523 = vadd.f32 %v522, -0.16666654
        %v524 = vmul.f32 %v519, %v523
        %v525 = vadd.f32 %v524, 1.0
        %v526 = vmul.f32 %v525, %v510
        %vm527 = vweird.f32 %v228
        %v528 = vadd.s32 %v511, 3
        %v529 = vand.u32 %v528, 3
        %vm530 = vcmp.lt.s32.totalorder %v529, 2
        %vm531 = vcmp.eq.s32.totalorder %v529, 0
        %v532 = vxor.u32 %v526, 2147483648
        %v533 = vsel %vm531, %v518, %v532
        %vm534 = vcmp.eq.s32.totalorder %v529, 2
        %v535 = vxor.u32 %v518, 2147483648
        %v536 = vsel %vm534, %v535, %v526
        %v537 = vsel %vm530, %v533, %v536
        %v538 = vsel %vm527, nan, %v537
        %v539 = vand.u32 2147483647, %v227
        %vm540 = vcmp.le.f32.partialorder %v539, 0.7853982
        %vm541 = vcmp.lt.s32.totalorder %v227, 0
        %v542 = vand.u32 %v227, 2139095040
        %v543 = vshrl.u32 %v542, 23
        %v544 = vsub.s32 %v543, 127
        %v545 = vand.u32 2147483647, %v227
        %v546 = vand.u32 %v545, 8388607
        %v547 = vor.u32 %v546, 8388608
        %v548 = vsub.s32 0, %v547
        %v549 = vadd.s32 %v544, 1
        %vm550 = vcmp.gt.s32.totalorder %v549, 0
        %v551 = vsel %vm550, %v549, 0
        %v552 = vshrl.u32 %v551, 5
        %v553 = vand.u32 %v551, 31
        %v554 = vsub.s32 32, %v553
        %v555 = vshrl.u32 683565275, %v554
        %v556 = vshll.u32 683565275, %v553
        %v557 = vshrl.u32 2475754826, %v554
        %v558 = vor.u32 %v556, %v557
        %v559 = vshll.u32 2475754826, %v553
        %v560 = vshrl.u32 2131351028, %v554
        %v561 = vor.u32 %v559, %v560
        %v562 = vshll.u32 2131351028, %v553
        %v563 = vshrl.u32 2102212464, %v554
        %v564 = vor.u32 %v562, %v563
        %v565 = vshll.u32 2102212464, %v553
        %v566 = vshrl.u32 920167782, %v554
        %v567 = vor.u32 %v565, %v566
        %v568 = vshll.u32 920167782, %v553
        %v569 = vshrl.u32 1326507024, %v554
        %v570 = vor.u32 %v568, %v569
        %vm571 = vcmp.lt.s32.totalorder %v552, 1
        %vm572 = vcmp.lt.s32.totalorder %v552, 2
        %vm573 = vcmp.lt.s32.totalorder %v552, 3
        %vm574 = vcmp.lt.s32.totalorder %v552, 4
        %v575 = vsel %vm571, %v555, %v558
        %v576 = vsel %vm574, %v564, 2102212464
        %v577 = vsel %vm573, %v561, %v576
        %v578 = vsel %vm572, %v575, %v577
        %v579 = vsel %vm571, %v558, %v561
        %v580 = vsel %vm574, %v567, 920167782
        %v581 = vsel %vm573, %v564, %v580
        %v582 = vsel %vm572, %v579, %v581
        %v583 = vsel %vm571, %v561, %v564
        %v584 = vsel %vm574, %v570, 1326507024
        %v585 = vsel %vm573, %v567, %v584
        %v586 = vsel %vm572, %v583, %v585
        %v587 = vshll.u32 %v547, 8
        %v588 = vand.u32 %v587, 65535
        %v589 = vshrl.u32 %v587, 16
        %v590 = vand.u32 %v586, 65535
        %v591 = vshrl.u32 %v586, 16
        %v592 = vmul.u32 %v588, %v590
        %v593 = vmul.u32 %v588, %v591
        %v594 = vmul.u32 %v589, %v590
        %v595 = vmul.u32 %v589, %v591
        %v596 = vshll.u32 %v593, 16
        %v597 = vshrl.u32 %v593, 16
        %v598 = vshll.u32 %v594, 16
        %v599 = vshrl.u32 %v594, 16
        %vm600 = vc.u32 %v592, %v596
        %v601 = vsel %vm600, 1, 0
        %v602 = vadd.s32 %v592, %v596
        %v603 = vadd.s32 %v595, %v601
        %vm604 = vc.u32 %v602, %v598
        %v605 = vsel %vm604, 1, 0
        %v606 = vadd.s32 %v602, %v598
        %v607 = vadd.s32 %v603, %v605
        %v608 = vadd.s32 %v607, %v597
        %v609 = vadd.s32 %v608, %v599
        %v610 = vand.u32 %v587, 65535
        %v611 = vshrl.u32 %v587, 16
        %v612 = vand.u32 %v582, 65535
        %v613 = vshrl.u32 %v582, 16
        %v614 = vmul.u32 %v610, %v612
        %v615 = vmul.u32 %v610, %v613
        %v616 = vmul.u32 %v611, %v612
        %v617 = vmul.u32 %v611, %v613
        %v618 = vshll.u32 %v615, 16
        %v619 = vshrl.u32 %v615, 16
        %v620 = vshll.u32 %v616, 16
        %v621 = vshrl.u32 %v616, 16
        %vm622 = vc.u32 %v614, %v618
        %v623 = vsel %vm622, 1, 0
        %v624 = vadd.s32 %v614, %v618
        %v625 = vadd.s32 %v617, %v623
        %vm626 = vc.u32 %v624, %v620
        %v627 = vsel %vm626, 1, 0
        %v628 = vadd.s32 %v624, %v620
        %v629 = vadd.s32 %v625, %v627
        %v630 = vadd.s32 %v629, %v619
        %v631 = vadd.s32 %v630, %v621
        %v632 = vmul.u32 %v587, %v578
        %v633 = vadd.s32 %v609, %v628
        %vm634 = vc.u32 %v609, %v628
        %v635 = vadd.s32 %v631, 1
        %v636 = vsel %vm634, %v635, %v631
        %v637 = vadd.s32 %v632, %v636
        %v638 = vadd.s32 %v637, 536870912
        %v639 = vshrl.u32 %v638, 30
        %v640 = vshll.u32 %v639, 30
        %v641 = vsub.s32 %v637, %v640
        %vm642 = vcmp.lt.s32.totalorder %v641, 0
        %v643 = vsub.s32 0, %v641
        %v644 = vsel %vm642, %v643, %v641
        %v645 = vclz %v644
        %v646 = vsub.s32 %v645, 2
        %vm647 = vcmp.gt.s32.totalorder 0, %v646
        %v648 = vsel %vm647, 0, %v646
        %v649 = vsub.s32 32, %v648
        %v650 = vshll.u32 %v641, %v648
        %v651 = vshrl.u32 %v633, %v649
        %v652 = vor.u32 %v650, %v651
        %v653 = vsub.s32 4294967266, %v648
        %v654 = vadd.s32 %v653, 127
        %v655 = vshll.u32 %v654, 23
        %v656 = vor.u32 4788187, %v655
        %v657 = vand.u32 2147483647, %v656
        %v659 = vcvt.s32.f32 %v652
        %v660 = vmul.f32 %v659, %v657
        %v661 = vxor.u32 %v660, 2147483648
        %v662 = vsel %vm541, %v661, %v660
        %v663 = vsub.s32 4, %v639
        %v664 = vsel %vm541, %v663, %v639
        %v665 = vsel %vm540, %v227, %v662
        %v666 = vsel %vm540, 0, %v664
        %v667 = vmul.f32 %v665, %v665
        %v668 = vmul.f32 %v667, -0.001358992
        %v669 = vadd.f32 %v668, 0.041655596
        %v670 = vmul.f32 %v667, %v669
        %v671 = vadd.f32 %v670, -0.4999988
        %v672 = vmul.f32 %v667, %v671
        %v673 = vadd.f32 1.0, %v672
        %v674 = vmul.f32 %v665, %v665
        %v675 = vmul.f32 %v674, -0.00019511016
        %v676 = vadd.f32 %v675, 0.008332121
        %v677 = vmul.f32 %v674, %v676
        %v678 = vadd.f32 %v677, -0.16666654
        %v679 = vmul.f32 %v674, %v678
        %v680 = vadd.f32 %v679, 1.0
        %v681 = vmul.f32 %v680, %v665
        %vm682 = vweird.f32 %v227
        %v683 = vand.u32 %v666, 3
        %vm684 = vcmp.lt.s32.totalorder %v683, 2
        %vm685 = vcmp.eq.s32.totalorder %v683, 0
        %v686 = vxor.u32 %v681, 2147483648
        %v687 = vsel %vm685, %v673, %v686
        %vm688 = vcmp.eq.s32.totalorder %v683, 2
        %v689 = vxor.u32 %v673, 2147483648
        %v690 = vsel %vm688, %v689, %v681
        %v691 = vsel %vm684, %v687, %v690
        %v692 = vsel %vm682, nan, %v691
        %v693 = vand.u32 2147483647, %v228
        %vm694 = vcmp.le.f32.partialorder %v693, 0.7853982
        %vm695 = vcmp.lt.s32.totalorder %v228, 0
        %v696 = vand.u32 %v228, 2139095040
        %v697 = vshrl.u32 %v696, 23
        %v698 = vsub.s32 %v697, 127
        %v699 = vand.u32 2147483647, %v228
        %v700 = vand.u32 %v699, 8388607
        %v701 = vor.u32 %v700, 8388608
        %v702 = vsub.s32 0, %v701
        %v703 = vadd.s32 %v698, 1
        %vm704 = vcmp.gt.s32.totalorder %v703, 0
        %v705 = vsel %vm704, %v703, 0
        %v706 = vshrl.u32 %v705, 5
        %v707 = vand.u32 %v705, 31
        %v708 = vsub.s32 32, %v707
        %v709 = vshrl.u32 683565275, %v708
        %v710 = vshll.u32 683565275, %v707
        %v711 = vshrl.u32 2475754826, %v708
        %v712 = vor.u32 %v710, %v711
        %v713 = vshll.u32 2475754826, %v707
        %v714 = vshrl.u32 2131351028, %v708
        %v715 = vor.u32 %v713, %v714
        %v716 = vshll.u32 2131351028, %v707
        %v717 = vshrl.u32 2102212464, %v708
        %v718 = vor.u32 %v716, %v717
        %v719 = vshll.u32 2102212464, %v707
        %v720 = vshrl.u32 920167782, %v708
        %v721 = vor.u32 %v719, %v720
        %v722 = vshll.u32 920167782, %v707
        %v723 = vshrl.u32 1326507024, %v708
        %v724 = vor.u32 %v722, %v723
        %vm725 = vcmp.lt.s32.totalorder %v706, 1
        %vm726 = vcmp.lt.s32.totalorder %v706, 2
        %vm727 = vcmp.lt.s32.totalorder %v706, 3
        %vm728 = vcmp.lt.s32.totalorder %v706, 4
        %v729 = vsel %vm725, %v709, %v712
        %v730 = vsel %vm728, %v718, 2102212464
        %v731 = vsel %vm727, %v715, %v730
        %v732 = vsel %vm726, %v729, %v731
        %v733 = vsel %vm725, %v712, %v715
        %v734 = vsel %vm728, %v721, 920167782
        %v735 = vsel %vm727, %v718, %v734
        %v736 = vsel %vm726, %v733, %v735
        %v737 = vsel %vm725, %v715, %v718
        %v738 = vsel %vm728, %v724, 1326507024
        %v739 = vsel %vm727, %v721, %v738
        %v740 = vsel %vm726, %v737, %v739
        %v741 = vshll.u32 %v701, 8
        %v742 = vand.u32 %v741, 65535
        %v743 = vshrl.u32 %v741, 16
        %v744 = vand.u32 %v740, 65535
        %v745 = vshrl.u32 %v740, 16
        %v746 = vmul.u32 %v742, %v744
        %v747 = vmul.u32 %v742, %v745
        %v748 = vmul.u32 %v743, %v744
        %v749 = vmul.u32 %v743, %v745
        %v750 = vshll.u32 %v747, 16
        %v751 = vshrl.u32 %v747, 16
        %v752 = vshll.u32 %v748, 16
        %v753 = vshrl.u32 %v748, 16
        %vm754 = vc.u32 %v746, %v750
        %v755 = vsel %vm754, 1, 0
        %v756 = vadd.s32 %v746, %v750
        %v757 = vadd.s32 %v749, %v755
        %vm758 = vc.u32 %v756, %v752
        %v759 = vsel %vm758, 1, 0
        %v760 = vadd.s32 %v756, %v752
        %v761 = vadd.s32 %v757, %v759
        %v762 = vadd.s32 %v761, %v751
        %v763 = vadd.s32 %v762, %v753
        %v764 = vand.u32 %v741, 65535
        %v765 = vshrl.u32 %v741, 16
        %v766 = vand.u32 %v736, 65535
        %v767 = vshrl.u32 %v736, 16
        %v768 = vmul.u32 %v764, %v766
        %v769 = vmul.u32 %v764, %v767
        %v770 = vmul.u32 %v765, %v766
        %v771 = vmul.u32 %v765, %v767
        %v772 = vshll.u32 %v769, 16
        %v773 = vshrl.u32 %v769, 16
        %v774 = vshll.u32 %v770, 16
        %v775 = vshrl.u32 %v770, 16
        %vm776 = vc.u32 %v768, %v772
        %v777 = vsel %vm776, 1, 0
        %v778 = vadd.s32 %v768, %v772
        %v779 = vadd.s32 %v771, %v777
        %vm780 = vc.u32 %v778, %v774
        %v781 = vsel %vm780, 1, 0
        %v782 = vadd.s32 %v778, %v774
        %v783 = vadd.s32 %v779, %v781
        %v784 = vadd.s32 %v783, %v773
        %v785 = vadd.s32 %v784, %v775
        %v786 = vmul.u32 %v741, %v732
        %v787 = vadd.s32 %v763, %v782
        %vm788 = vc.u32 %v763, %v782
        %v789 = vadd.s32 %v785, 1
        %v790 = vsel %vm788, %v789, %v785
        %v791 = vadd.s32 %v786, %v790
        %v792 = vadd.s32 %v791, 536870912
        %v793 = vshrl.u32 %v792, 30
        %v794 = vshll.u32 %v793, 30
        %v795 = vsub.s32 %v791, %v794
        %vm796 = vcmp.lt.s32.totalorder %v795, 0
        %v797 = vsub.s32 0, %v795
        %v798 = vsel %vm796, %v797, %v795
        %v799 = vclz %v798
        %v800 = vsub.s32 %v799, 2
        %vm801 = vcmp.gt.s32.totalorder 0, %v800
        %v802 = vsel %vm801, 0, %v800
        %v803 = vsub.s32 32, %v802
        %v804 = vshll.u32 %v795, %v802
        %v805 = vshrl.u32 %v787, %v803
        %v806 = vor.u32 %v804, %v805
        %v807 = vsub.s32 4294967266, %v802
        %v808 = vadd.s32 %v807, 127
        %v809 = vshll.u32 %v808, 23
        %v810 = vor.u32 4788187, %v809
        %v811 = vand.u32 2147483647, %v810
        %v813 = vcvt.s32.f32 %v806
        %v814 = vmul.f32 %v813, %v811
        %v815 = vxor.u32 %v814, 2147483648
        %v816 = vsel %vm695, %v815, %v814
        %v817 = vsub.s32 4, %v793
        %v818 = vsel %vm695, %v817, %v793
        %v819 = vsel %vm694, %v228, %v816
        %v820 = vsel %vm694, 0, %v818
        %v821 = vmul.f32 %v819, %v819
        %v822 = vmul.f32 %v821, -0.001358992
        %v823 = vadd.f32 %v822, 0.041655596
        %v824 = vmul.f32 %v821, %v823
        %v825 = vadd.f32 %v824, -0.4999988
        %v826 = vmul.f32 %v821, %v825
        %v827 = vadd.f32 1.0, %v826
        %v828 = vmul.f32 %v819, %v819
        %v829 = vmul.f32 %v828, -0.00019511016
        %v830 = vadd.f32 %v829, 0.008332121
        %v831 = vmul.f32 %v828, %v830
        %v832 = vadd.f32 %v831, -0.16666654
        %v833 = vmul.f32 %v828, %v832
        %v834 = vadd.f32 %v833, 1.0
        %v835 = vmul.f32 %v834, %v819
        %vm836 = vweird.f32 %v228
        %v837 = vand.u32 %v820, 3
        %vm838 = vcmp.lt.s32.totalorder %v837, 2
        %vm839 = vcmp.eq.s32.totalorder %v837, 0
        %v840 = vxor.u32 %v835, 2147483648
        %v841 = vsel %vm839, %v827, %v840
        %vm842 = vcmp.eq.s32.totalorder %v837, 2
        %v843 = vxor.u32 %v827, 2147483648
        %v844 = vsel %vm842, %v843, %v835
        %v845 = vsel %vm838, %v841, %v844
        %v846 = vsel %vm836, nan, %v845
        %v847 = vsel %vm213, %v383, %v692
        %v848 = vsel %vm214, %v538, %v846
        %s849 = scalar_lea.vmem %s1, 512
        %v850 = vld [vmem:[%s849] sm:$0xff]
        %v851 = vld [vmem:[%s849 + $0x8] sm:$0xff]
        %v852 = vld [vmem:[%s849 + $0x10] sm:$0xff]
        %v853 = vld [vmem:[%s849 + $0x18] sm:$0xff]
        %v854 = vld [vmem:[%s849 + $0x20] sm:$0xff]
        %v855 = vld [vmem:[%s849 + $0x28] sm:$0xff]
        %v856 = vld [vmem:[%s849 + $0x30] sm:$0xff]
        %v857 = vld [vmem:[%s849 + $0x38] sm:$0xff]
        %v858 = vld [vmem:[%s1] sm:$0xff]
        %v859 = vld [vmem:[%s1 + $0x8] sm:$0xff]
        %v860 = vld [vmem:[%s1 + $0x10] sm:$0xff]
        %v861 = vld [vmem:[%s1 + $0x18] sm:$0xff]
        %v862 = vld [vmem:[%s1 + $0x20] sm:$0xff]
        %v863 = vld [vmem:[%s1 + $0x28] sm:$0xff]
        %v864 = vld [vmem:[%s1 + $0x30] sm:$0xff]
        %v865 = vld [vmem:[%s1 + $0x38] sm:$0xff]
        %867 = vset.pattern.permute.xlu0 0
        %868 = vperm.xlu0 %867, %v850
        %v869 = vpop.permute.xlu0 %868
        %872 = vset.pattern.permute.xlu0 0
        %873 = vperm.xlu0 %872, %v851
        %v874 = vpop.permute.xlu0 %873
        %877 = vset.pattern.permute.xlu0 0
        %878 = vperm.xlu0 %877, %v852
        %v879 = vpop.permute.xlu0 %878
        %882 = vset.pattern.permute.xlu0 0
        %883 = vperm.xlu0 %882, %v853
        %v884 = vpop.permute.xlu0 %883
        %887 = vset.pattern.permute.xlu0 0
        %888 = vperm.xlu0 %887, %v854
        %v889 = vpop.permute.xlu0 %888
        %892 = vset.pattern.permute.xlu0 0
        %893 = vperm.xlu0 %892, %v855
        %v894 = vpop.permute.xlu0 %893
        %897 = vset.pattern.permute.xlu0 0
        %898 = vperm.xlu0 %897, %v856
        %v899 = vpop.permute.xlu0 %898
        %902 = vset.pattern.permute.xlu0 0
        %903 = vperm.xlu0 %902, %v857
        %v904 = vpop.permute.xlu0 %903
        %vm906 = vcmask 261120
        %v908 = vsel %vm906, %v858, 0
        %v911 = vsel %vm906, %v859, 0
        %v914 = vsel %vm906, %v860, 0
        %v917 = vsel %vm906, %v861, 0
        %v920 = vsel %vm906, %v862, 0
        %v923 = vsel %vm906, %v863, 0
        %v926 = vsel %vm906, %v864, 0
        %v929 = vsel %vm906, %v865, 0
        %931 = vmatpush.msra.mxu0 0.0
        %932 = vmatpush.msra.mxu0 0.0
        %933 = vmatpush.msra.mxu0 0.0
        %934 = vmatpush.msra.mxu0 0.0
        %935 = vmatpush.msra.mxu0 0.0
        %936 = vmatpush.msra.mxu0 0.0
        %937 = vmatpush.msra.mxu0 0.0
        %938 = vmatpush.msra.mxu0 0.0
        %939 = vmatpush.msra.mxu0 0.0
        %940 = vmatpush.msra.mxu0 0.0
        %941 = vmatpush.msra.mxu0 0.0
        %942 = vmatpush.msra.mxu0 0.0
        %943 = vmatpush.msra.mxu0 %v848
        %944 = vmatpush.msra.mxu0 %v847
        %945 = vmatpush.msra.mxu0 %v209
        %946 = vmatpush.msra.mxu0 %v208
        %947 = vmatmul.f32.gmra.mxu0 %v908
        %v948 = vpop.f32.mrf.mxu0
        %v949 = vadd.f32 %v869, %v948
        %950 = vmatmul.f32.gmra.mxu0 %v911
        %v951 = vpop.f32.mrf.mxu0
        %v952 = vadd.f32 %v874, %v951
        %953 = vmatmul.f32.gmra.mxu0 %v914
        %v954 = vpop.f32.mrf.mxu0
        %v955 = vadd.f32 %v879, %v954
        %956 = vmatmul.f32.gmra.mxu0 %v917
        %v957 = vpop.f32.mrf.mxu0
        %v958 = vadd.f32 %v884, %v957
        %959 = vmatmul.f32.gmra.mxu0 %v920
        %v960 = vpop.f32.mrf.mxu0
        %v961 = vadd.f32 %v889, %v960
        %962 = vmatmul.f32.gmra.mxu0 %v923
        %v963 = vpop.f32.mrf.mxu0
        %v964 = vadd.f32 %v894, %v963
        %965 = vmatmul.f32.gmra.mxu0 %v926
        %v966 = vpop.f32.mrf.mxu0
        %v967 = vadd.f32 %v899, %v966
        %968 = vmatmul.f32.gmra.mxu0 %v929
        %v969 = vpop.f32.mrf.mxu0
        %v970 = vadd.f32 %v904, %v969
        %971 = vdwg.mxu0
        %vm972 = vcmp.gt.f32.partialorder %v949, 0.0
        %vm973 = vcmp.gt.f32.partialorder %v952, 0.0
        %vm974 = vcmp.gt.f32.partialorder %v955, 0.0
        %vm975 = vcmp.gt.f32.partialorder %v958, 0.0
        %vm976 = vcmp.gt.f32.partialorder %v961, 0.0
        %vm977 = vcmp.gt.f32.partialorder %v964, 0.0
        %vm978 = vcmp.gt.f32.partialorder %v967, 0.0
        %vm979 = vcmp.gt.f32.partialorder %v970, 0.0
        %v980 = vmul.f32 %v949, 0.01
        %v981 = vmul.f32 %v952, 0.01
        %v982 = vmul.f32 %v955, 0.01
        %v983 = vmul.f32 %v958, 0.01
        %v984 = vmul.f32 %v961, 0.01
        %v985 = vmul.f32 %v964, 0.01
        %v986 = vmul.f32 %v967, 0.01
        %v987 = vmul.f32 %v970, 0.01
        %v988 = vsel %vm972, %v949, %v980
        %v989 = vsel %vm973, %v952, %v981
        %v990 = vsel %vm974, %v955, %v982
        %v991 = vsel %vm975, %v958, %v983
        %v992 = vsel %vm976, %v961, %v984
        %v993 = vsel %vm977, %v964, %v985
        %v994 = vsel %vm978, %v967, %v986
        %v995 = vsel %vm979, %v970, %v987
        %v996 = vadd.f32 %v988, %v992
        %v997 = vadd.f32 %v989, %v993
        %v998 = vadd.f32 %v990, %v994
        %v999 = vadd.f32 %v991, %v995
        %s1000 = scalar_lea.vmem %s1, 64
        %v1001 = vld [vmem:[%s1000] sm:$0xff]
        %v1002 = vld [vmem:[%s1000 + $0x8] sm:$0xff]
        %v1003 = vld [vmem:[%s1000 + $0x10] sm:$0xff]
        %v1004 = vld [vmem:[%s1000 + $0x18] sm:$0xff]
        %v1005 = vld [vmem:[%s1000 + $0x20] sm:$0xff]
        %v1006 = vld [vmem:[%s1000 + $0x28] sm:$0xff]
        %v1007 = vld [vmem:[%s1000 + $0x30] sm:$0xff]
        %v1008 = vld [vmem:[%s1000 + $0x38] sm:$0xff]
        %1009 = vset.pattern.permute.xlu0 1
        %1010 = vperm.xlu0 %1009, %v850
        %v1011 = vpop.permute.xlu0 %1010
        %1013 = vset.pattern.permute.xlu0 1
        %1014 = vperm.xlu0 %1013, %v851
        %v1015 = vpop.permute.xlu0 %1014
        %1017 = vset.pattern.permute.xlu0 1
        %1018 = vperm.xlu0 %1017, %v852
        %v1019 = vpop.permute.xlu0 %1018
        %1021 = vset.pattern.permute.xlu0 1
        %1022 = vperm.xlu0 %1021, %v853
        %v1023 = vpop.permute.xlu0 %1022
        %1025 = vset.pattern.permute.xlu0 1
        %1026 = vperm.xlu0 %1025, %v854
        %v1027 = vpop.permute.xlu0 %1026
        %1028 = vset.pattern.permute.xlu0 1
        %1029 = vperm.xlu0 %1028, %v855
        %v1030 = vpop.permute.xlu0 %1029
        %1031 = vset.pattern.permute.xlu0 1
        %1032 = vperm.xlu0 %1031, %v856
        %v1033 = vpop.permute.xlu0 %1032
        %1034 = vset.pattern.permute.xlu0 1
        %1035 = vperm.xlu0 %1034, %v857
        %v1036 = vpop.permute.xlu0 %1035
        %v1038 = vsel %vm906, %v1001, 0
        %v1041 = vsel %vm906, %v1002, 0
        %v1044 = vsel %vm906, %v1003, 0
        %v1047 = vsel %vm906, %v1004, 0
        %v1050 = vsel %vm906, %v1005, 0
        %v1053 = vsel %vm906, %v1006, 0
        %v1056 = vsel %vm906, %v1007, 0
        %v1059 = vsel %vm906, %v1008, 0
        %1061 = vmatpush.msra.mxu0 0.0
        %1062 = vmatpush.msra.mxu0 0.0
        %1063 = vmatpush.msra.mxu0 0.0
        %1064 = vmatpush.msra.mxu0 0.0
        %1065 = vmatpush.msra.mxu0 0.0
        %1066 = vmatpush.msra.mxu0 0.0
        %1067 = vmatpush.msra.mxu0 0.0
        %1068 = vmatpush.msra.mxu0 0.0
        %1069 = vmatpush.msra.mxu0 0.0
        %1070 = vmatpush.msra.mxu0 0.0
        %1071 = vmatpush.msra.mxu0 0.0
        %1072 = vmatpush.msra.mxu0 0.0
        %1073 = vmatpush.msra.mxu0 %v999
        %1074 = vmatpush.msra.mxu0 %v998
        %1075 = vmatpush.msra.mxu0 %v997
        %1076 = vmatpush.msra.mxu0 %v996
        %1077 = vmatmul.f32.gmra.mxu0 %v1038
        %v1078 = vpop.f32.mrf.mxu0
        %v1079 = vadd.f32 %v1011, %v1078
        %1080 = vmatmul.f32.gmra.mxu0 %v1041
        %v1081 = vpop.f32.mrf.mxu0
        %v1082 = vadd.f32 %v1015, %v1081
        %1083 = vmatmul.f32.gmra.mxu0 %v1044
        %v1084 = vpop.f32.mrf.mxu0
        %v1085 = vadd.f32 %v1019, %v1084
        %1086 = vmatmul.f32.gmra.mxu0 %v1047
        %v1087 = vpop.f32.mrf.mxu0
        %v1088 = vadd.f32 %v1023, %v1087
        %1089 = vmatmul.f32.gmra.mxu0 %v1050
        %v1090 = vpop.f32.mrf.mxu0
        %1091 = vmatmul.f32.gmra.mxu0 %v1053
        %v1092 = vpop.f32.mrf.mxu0
        %1093 = vmatmul.f32.gmra.mxu0 %v1056
        %v1094 = vpop.f32.mrf.mxu0
        %1095 = vmatmul.f32.gmra.mxu0 %v1059
        %v1096 = vpop.f32.mrf.mxu0
        %1097 = vdwg.mxu0
        %vm1098 = vcmp.gt.f32.partialorder %v1079, 0.0
        %vm1099 = vcmp.gt.f32.partialorder %v1082, 0.0
        %vm1100 = vcmp.gt.f32.partialorder %v1085, 0.0
        %vm1101 = vcmp.gt.f32.partialorder %v1088, 0.0
        %v1102 = vmul.f32 %v1079, 0.01
        %v1103 = vmul.f32 %v1082, 0.01
        %v1104 = vmul.f32 %v1085, 0.01
        %v1105 = vmul.f32 %v1088, 0.01
        %v1106 = vsel %vm1098, %v1079, %v1102
        %v1107 = vsel %vm1099, %v1082, %v1103
        %v1108 = vsel %vm1100, %v1085, %v1104
        %v1109 = vsel %vm1101, %v1088, %v1105
        %s1110 = scalar_lea.vmem %s1, 128
        %v1111 = vld [vmem:[%s1110] sm:$0xff]
        %v1112 = vld [vmem:[%s1110 + $0x8] sm:$0xff]
        %v1113 = vld [vmem:[%s1110 + $0x10] sm:$0xff]
        %v1114 = vld [vmem:[%s1110 + $0x18] sm:$0xff]
        %v1115 = vld [vmem:[%s1110 + $0x20] sm:$0xff]
        %v1116 = vld [vmem:[%s1110 + $0x28] sm:$0xff]
        %v1117 = vld [vmem:[%s1110 + $0x30] sm:$0xff]
        %v1118 = vld [vmem:[%s1110 + $0x38] sm:$0xff]
        %1119 = vset.pattern.permute.xlu0 2
        %1120 = vperm.xlu0 %1119, %v850
        %v1121 = vpop.permute.xlu0 %1120
        %1123 = vset.pattern.permute.xlu0 2
        %1124 = vperm.xlu0 %1123, %v851
        %v1125 = vpop.permute.xlu0 %1124
        %1127 = vset.pattern.permute.xlu0 2
        %1128 = vperm.xlu0 %1127, %v852
        %v1129 = vpop.permute.xlu0 %1128
        %1131 = vset.pattern.permute.xlu0 2
        %1132 = vperm.xlu0 %1131, %v853
        %v1133 = vpop.permute.xlu0 %1132
        %1135 = vset.pattern.permute.xlu0 2
        %1136 = vperm.xlu0 %1135, %v854
        %v1137 = vpop.permute.xlu0 %1136
        %1138 = vset.pattern.permute.xlu0 2
        %1139 = vperm.xlu0 %1138, %v855
        %v1140 = vpop.permute.xlu0 %1139
        %1141 = vset.pattern.permute.xlu0 2
        %1142 = vperm.xlu0 %1141, %v856
        %v1143 = vpop.permute.xlu0 %1142
        %1144 = vset.pattern.permute.xlu0 2
        %1145 = vperm.xlu0 %1144, %v857
        %v1146 = vpop.permute.xlu0 %1145
        %v1148 = vsel %vm906, %v1111, 0
        %v1151 = vsel %vm906, %v1112, 0
        %v1154 = vsel %vm906, %v1113, 0
        %v1157 = vsel %vm906, %v1114, 0
        %v1160 = vsel %vm906, %v1115, 0
        %v1163 = vsel %vm906, %v1116, 0
        %v1166 = vsel %vm906, %v1117, 0
        %v1169 = vsel %vm906, %v1118, 0
        %1171 = vmatpush.msra.mxu0 0.0
        %1172 = vmatpush.msra.mxu0 0.0
        %1173 = vmatpush.msra.mxu0 0.0
        %1174 = vmatpush.msra.mxu0 0.0
        %1175 = vmatpush.msra.mxu0 0.0
        %1176 = vmatpush.msra.mxu0 0.0
        %1177 = vmatpush.msra.mxu0 0.0
        %1178 = vmatpush.msra.mxu0 0.0
        %1179 = vmatpush.msra.mxu0 0.0
        %1180 = vmatpush.msra.mxu0 0.0
        %1181 = vmatpush.msra.mxu0 0.0
        %1182 = vmatpush.msra.mxu0 0.0
        %1183 = vmatpush.msra.mxu0 %v1109
        %1184 = vmatpush.msra.mxu0 %v1108
        %1185 = vmatpush.msra.mxu0 %v1107
        %1186 = vmatpush.msra.mxu0 %v1106
        %1187 = vmatmul.f32.gmra.mxu0 %v1148
        %v1188 = vpop.f32.mrf.mxu0
        %v1189 = vadd.f32 %v1121, %v1188
        %1190 = vmatmul.f32.gmra.mxu0 %v1151
        %v1191 = vpop.f32.mrf.mxu0
        %v1192 = vadd.f32 %v1125, %v1191
        %1193 = vmatmul.f32.gmra.mxu0 %v1154
        %v1194 = vpop.f32.mrf.mxu0
        %v1195 = vadd.f32 %v1129, %v1194
        %1196 = vmatmul.f32.gmra.mxu0 %v1157
        %v1197 = vpop.f32.mrf.mxu0
        %v1198 = vadd.f32 %v1133, %v1197
        %1199 = vmatmul.f32.gmra.mxu0 %v1160
        %v1200 = vpop.f32.mrf.mxu0
        %1201 = vmatmul.f32.gmra.mxu0 %v1163
        %v1202 = vpop.f32.mrf.mxu0
        %1203 = vmatmul.f32.gmra.mxu0 %v1166
        %v1204 = vpop.f32.mrf.mxu0
        %1205 = vmatmul.f32.gmra.mxu0 %v1169
        %v1206 = vpop.f32.mrf.mxu0
        %1207 = vdwg.mxu0
        %s1208 = scalar_lea.vmem %s1, 192
        %v1209 = vld [vmem:[%s1208] sm:$0xff]
        %v1210 = vld [vmem:[%s1208 + $0x8] sm:$0xff]
        %v1211 = vld [vmem:[%s1208 + $0x10] sm:$0xff]
        %v1212 = vld [vmem:[%s1208 + $0x18] sm:$0xff]
        %v1213 = vld [vmem:[%s1208 + $0x20] sm:$0xff]
        %v1214 = vld [vmem:[%s1208 + $0x28] sm:$0xff]
        %v1215 = vld [vmem:[%s1208 + $0x30] sm:$0xff]
        %v1216 = vld [vmem:[%s1208 + $0x38] sm:$0xff]
        %1217 = vset.pattern.permute.xlu0 3
        %1218 = vperm.xlu0 %1217, %v850
        %v1219 = vpop.permute.xlu0 %1218
        %1221 = vset.pattern.permute.xlu0 3
        %1222 = vperm.xlu0 %1221, %v851
        %v1223 = vpop.permute.xlu0 %1222
        %1225 = vset.pattern.permute.xlu0 3
        %1226 = vperm.xlu0 %1225, %v852
        %v1227 = vpop.permute.xlu0 %1226
        %1229 = vset.pattern.permute.xlu0 3
        %1230 = vperm.xlu0 %1229, %v853
        %v1231 = vpop.permute.xlu0 %1230
        %1233 = vset.pattern.permute.xlu0 3
        %1234 = vperm.xlu0 %1233, %v854
        %v1235 = vpop.permute.xlu0 %1234
        %1237 = vset.pattern.permute.xlu0 3
        %1238 = vperm.xlu0 %1237, %v855
        %v1239 = vpop.permute.xlu0 %1238
        %1241 = vset.pattern.permute.xlu0 3
        %1242 = vperm.xlu0 %1241, %v856
        %v1243 = vpop.permute.xlu0 %1242
        %1245 = vset.pattern.permute.xlu0 3
        %1246 = vperm.xlu0 %1245, %v857
        %v1247 = vpop.permute.xlu0 %1246
        %v1250 = vsel %vm906, %v1209, 0
        %v1253 = vsel %vm906, %v1210, 0
        %v1256 = vsel %vm906, %v1211, 0
        %v1259 = vsel %vm906, %v1212, 0
        %v1262 = vsel %vm906, %v1213, 0
        %v1265 = vsel %vm906, %v1214, 0
        %v1268 = vsel %vm906, %v1215, 0
        %v1271 = vsel %vm906, %v1216, 0
        %1273 = vmatpush.msra.mxu0 0.0
        %1274 = vmatpush.msra.mxu0 0.0
        %1275 = vmatpush.msra.mxu0 0.0
        %1276 = vmatpush.msra.mxu0 0.0
        %1277 = vmatpush.msra.mxu0 0.0
        %1278 = vmatpush.msra.mxu0 0.0
        %1279 = vmatpush.msra.mxu0 0.0
        %1280 = vmatpush.msra.mxu0 0.0
        %1281 = vmatpush.msra.mxu0 0.0
        %1282 = vmatpush.msra.mxu0 0.0
        %1283 = vmatpush.msra.mxu0 0.0
        %1284 = vmatpush.msra.mxu0 0.0
        %1285 = vmatpush.msra.mxu0 %v1198
        %1286 = vmatpush.msra.mxu0 %v1195
        %1287 = vmatpush.msra.mxu0 %v1192
        %1288 = vmatpush.msra.mxu0 %v1189
        %1289 = vmatmul.f32.gmra.mxu0 %v1250
        %v1290 = vpop.f32.mrf.mxu0
        %v1291 = vadd.f32 %v1219, %v1290
        %1292 = vmatmul.f32.gmra.mxu0 %v1253
        %v1293 = vpop.f32.mrf.mxu0
        %v1294 = vadd.f32 %v1223, %v1293
        %1295 = vmatmul.f32.gmra.mxu0 %v1256
        %v1296 = vpop.f32.mrf.mxu0
        %v1297 = vadd.f32 %v1227, %v1296
        %1298 = vmatmul.f32.gmra.mxu0 %v1259
        %v1299 = vpop.f32.mrf.mxu0
        %v1300 = vadd.f32 %v1231, %v1299
        %1301 = vmatmul.f32.gmra.mxu0 %v1262
        %v1302 = vpop.f32.mrf.mxu0
        %v1303 = vadd.f32 %v1235, %v1302
        %1304 = vmatmul.f32.gmra.mxu0 %v1265
        %v1305 = vpop.f32.mrf.mxu0
        %v1306 = vadd.f32 %v1239, %v1305
        %1307 = vmatmul.f32.gmra.mxu0 %v1268
        %v1308 = vpop.f32.mrf.mxu0
        %v1309 = vadd.f32 %v1243, %v1308
        %1310 = vmatmul.f32.gmra.mxu0 %v1271
        %v1311 = vpop.f32.mrf.mxu0
        %v1312 = vadd.f32 %v1247, %v1311
        %1313 = vdwg.mxu0
        %vm1314 = vcmp.gt.f32.partialorder %v1303, 0.0
        %vm1315 = vcmp.gt.f32.partialorder %v1306, 0.0
        %vm1316 = vcmp.gt.f32.partialorder %v1309, 0.0
        %vm1317 = vcmp.gt.f32.partialorder %v1312, 0.0
        %v1318 = vmul.f32 %v1303, 0.01
        %v1319 = vmul.f32 %v1306, 0.01
        %v1320 = vmul.f32 %v1309, 0.01
        %v1321 = vmul.f32 %v1312, 0.01
        %v1322 = vsel %vm1314, %v1303, %v1318
        %v1323 = vsel %vm1315, %v1306, %v1319
        %v1324 = vsel %vm1316, %v1309, %v1320
        %v1325 = vsel %vm1317, %v1312, %v1321
        %v1326 = vadd.f32 %v1291, %v1322
        %v1327 = vadd.f32 %v1294, %v1323
        %v1328 = vadd.f32 %v1297, %v1324
        %v1329 = vadd.f32 %v1300, %v1325
        %s1330 = scalar_lea.vmem %s1, 256
        %v1331 = vld [vmem:[%s1330] sm:$0xff]
        %v1332 = vld [vmem:[%s1330 + $0x8] sm:$0xff]
        %v1333 = vld [vmem:[%s1330 + $0x10] sm:$0xff]
        %v1334 = vld [vmem:[%s1330 + $0x18] sm:$0xff]
        %v1335 = vld [vmem:[%s1330 + $0x20] sm:$0xff]
        %v1336 = vld [vmem:[%s1330 + $0x28] sm:$0xff]
        %v1337 = vld [vmem:[%s1330 + $0x30] sm:$0xff]
        %v1338 = vld [vmem:[%s1330 + $0x38] sm:$0xff]
        %1339 = vset.pattern.permute.xlu0 4
        %1340 = vperm.xlu0 %1339, %v850
        %v1341 = vpop.permute.xlu0 %1340
        %1343 = vset.pattern.permute.xlu0 4
        %1344 = vperm.xlu0 %1343, %v851
        %v1345 = vpop.permute.xlu0 %1344
        %1347 = vset.pattern.permute.xlu0 4
        %1348 = vperm.xlu0 %1347, %v852
        %v1349 = vpop.permute.xlu0 %1348
        %1351 = vset.pattern.permute.xlu0 4
        %1352 = vperm.xlu0 %1351, %v853
        %v1353 = vpop.permute.xlu0 %1352
        %1355 = vset.pattern.permute.xlu0 4
        %1356 = vperm.xlu0 %1355, %v854
        %v1357 = vpop.permute.xlu0 %1356
        %1359 = vset.pattern.permute.xlu0 4
        %1360 = vperm.xlu0 %1359, %v855
        %v1361 = vpop.permute.xlu0 %1360
        %1363 = vset.pattern.permute.xlu0 4
        %1364 = vperm.xlu0 %1363, %v856
        %v1365 = vpop.permute.xlu0 %1364
        %1367 = vset.pattern.permute.xlu0 4
        %1368 = vperm.xlu0 %1367, %v857
        %v1369 = vpop.permute.xlu0 %1368
        %v1372 = vsel %vm906, %v1331, 0
        %v1375 = vsel %vm906, %v1332, 0
        %v1378 = vsel %vm906, %v1333, 0
        %v1381 = vsel %vm906, %v1334, 0
        %v1384 = vsel %vm906, %v1335, 0
        %v1387 = vsel %vm906, %v1336, 0
        %v1390 = vsel %vm906, %v1337, 0
        %v1393 = vsel %vm906, %v1338, 0
        %1395 = vmatpush.msra.mxu0 0.0
        %1396 = vmatpush.msra.mxu0 0.0
        %1397 = vmatpush.msra.mxu0 0.0
        %1398 = vmatpush.msra.mxu0 0.0
        %1399 = vmatpush.msra.mxu0 0.0
        %1400 = vmatpush.msra.mxu0 0.0
        %1401 = vmatpush.msra.mxu0 0.0
        %1402 = vmatpush.msra.mxu0 0.0
        %1403 = vmatpush.msra.mxu0 0.0
        %1404 = vmatpush.msra.mxu0 0.0
        %1405 = vmatpush.msra.mxu0 0.0
        %1406 = vmatpush.msra.mxu0 0.0
        %1407 = vmatpush.msra.mxu0 %v1329
        %1408 = vmatpush.msra.mxu0 %v1328
        %1409 = vmatpush.msra.mxu0 %v1327
        %1410 = vmatpush.msra.mxu0 %v1326
        %1411 = vmatmul.f32.gmra.mxu0 %v1372
        %v1412 = vpop.f32.mrf.mxu0
        %v1413 = vadd.f32 %v1341, %v1412
        %1414 = vmatmul.f32.gmra.mxu0 %v1375
        %v1415 = vpop.f32.mrf.mxu0
        %v1416 = vadd.f32 %v1345, %v1415
        %1417 = vmatmul.f32.gmra.mxu0 %v1378
        %v1418 = vpop.f32.mrf.mxu0
        %v1419 = vadd.f32 %v1349, %v1418
        %1420 = vmatmul.f32.gmra.mxu0 %v1381
        %v1421 = vpop.f32.mrf.mxu0
        %v1422 = vadd.f32 %v1353, %v1421
        %1423 = vmatmul.f32.gmra.mxu0 %v1384
        %v1424 = vpop.f32.mrf.mxu0
        %v1425 = vadd.f32 %v1357, %v1424
        %1426 = vmatmul.f32.gmra.mxu0 %v1387
        %v1427 = vpop.f32.mrf.mxu0
        %v1428 = vadd.f32 %v1361, %v1427
        %1429 = vmatmul.f32.gmra.mxu0 %v1390
        %v1430 = vpop.f32.mrf.mxu0
        %v1431 = vadd.f32 %v1365, %v1430
        %1432 = vmatmul.f32.gmra.mxu0 %v1393
        %v1433 = vpop.f32.mrf.mxu0
        %v1434 = vadd.f32 %v1369, %v1433
        %1435 = vdwg.mxu0
        %vm1436 = vcmp.gt.f32.partialorder %v1425, 0.0
        %vm1437 = vcmp.gt.f32.partialorder %v1428, 0.0
        %vm1438 = vcmp.gt.f32.partialorder %v1431, 0.0
        %vm1439 = vcmp.gt.f32.partialorder %v1434, 0.0
        %v1440 = vmul.f32 %v1425, 0.01
        %v1441 = vmul.f32 %v1428, 0.01
        %v1442 = vmul.f32 %v1431, 0.01
        %v1443 = vmul.f32 %v1434, 0.01
        %v1444 = vsel %vm1436, %v1425, %v1440
        %v1445 = vsel %vm1437, %v1428, %v1441
        %v1446 = vsel %vm1438, %v1431, %v1442
        %v1447 = vsel %vm1439, %v1434, %v1443
        %v1448 = vadd.f32 %v1413, %v1444
        %v1449 = vadd.f32 %v1416, %v1445
        %v1450 = vadd.f32 %v1419, %v1446
        %v1451 = vadd.f32 %v1422, %v1447
        %s1452 = scalar_lea.vmem %s1, 320
        %v1453 = vld [vmem:[%s1452] sm:$0xff]
        %v1454 = vld [vmem:[%s1452 + $0x8] sm:$0xff]
        %v1455 = vld [vmem:[%s1452 + $0x10] sm:$0xff]
        %v1456 = vld [vmem:[%s1452 + $0x18] sm:$0xff]
        %v1457 = vld [vmem:[%s1452 + $0x20] sm:$0xff]
        %v1458 = vld [vmem:[%s1452 + $0x28] sm:$0xff]
        %v1459 = vld [vmem:[%s1452 + $0x30] sm:$0xff]
        %v1460 = vld [vmem:[%s1452 + $0x38] sm:$0xff]
        %1461 = vset.pattern.permute.xlu0 5
        %1462 = vperm.xlu0 %1461, %v850
        %v1463 = vpop.permute.xlu0 %1462
        %1465 = vset.pattern.permute.xlu0 5
        %1466 = vperm.xlu0 %1465, %v851
        %v1467 = vpop.permute.xlu0 %1466
        %1469 = vset.pattern.permute.xlu0 5
        %1470 = vperm.xlu0 %1469, %v852
        %v1471 = vpop.permute.xlu0 %1470
        %1473 = vset.pattern.permute.xlu0 5
        %1474 = vperm.xlu0 %1473, %v853
        %v1475 = vpop.permute.xlu0 %1474
        %1477 = vset.pattern.permute.xlu0 5
        %1478 = vperm.xlu0 %1477, %v854
        %v1479 = vpop.permute.xlu0 %1478
        %1481 = vset.pattern.permute.xlu0 5
        %1482 = vperm.xlu0 %1481, %v855
        %v1483 = vpop.permute.xlu0 %1482
        %1485 = vset.pattern.permute.xlu0 5
        %1486 = vperm.xlu0 %1485, %v856
        %v1487 = vpop.permute.xlu0 %1486
        %1489 = vset.pattern.permute.xlu0 5
        %1490 = vperm.xlu0 %1489, %v857
        %v1491 = vpop.permute.xlu0 %1490
        %v1494 = vsel %vm906, %v1453, 0
        %v1497 = vsel %vm906, %v1454, 0
        %v1500 = vsel %vm906, %v1455, 0
        %v1503 = vsel %vm906, %v1456, 0
        %v1506 = vsel %vm906, %v1457, 0
        %v1509 = vsel %vm906, %v1458, 0
        %v1512 = vsel %vm906, %v1459, 0
        %v1515 = vsel %vm906, %v1460, 0
        %1517 = vmatpush.msra.mxu0 0.0
        %1518 = vmatpush.msra.mxu0 0.0
        %1519 = vmatpush.msra.mxu0 0.0
        %1520 = vmatpush.msra.mxu0 0.0
        %1521 = vmatpush.msra.mxu0 0.0
        %1522 = vmatpush.msra.mxu0 0.0
        %1523 = vmatpush.msra.mxu0 0.0
        %1524 = vmatpush.msra.mxu0 0.0
        %1525 = vmatpush.msra.mxu0 0.0
        %1526 = vmatpush.msra.mxu0 0.0
        %1527 = vmatpush.msra.mxu0 0.0
        %1528 = vmatpush.msra.mxu0 0.0
        %1529 = vmatpush.msra.mxu0 %v1451
        %1530 = vmatpush.msra.mxu0 %v1450
        %1531 = vmatpush.msra.mxu0 %v1449
        %1532 = vmatpush.msra.mxu0 %v1448
        %1533 = vmatmul.f32.gmra.mxu0 %v1494
        %v1534 = vpop.f32.mrf.mxu0
        %v1535 = vadd.f32 %v1463, %v1534
        %1536 = vmatmul.f32.gmra.mxu0 %v1497
        %v1537 = vpop.f32.mrf.mxu0
        %v1538 = vadd.f32 %v1467, %v1537
        %1539 = vmatmul.f32.gmra.mxu0 %v1500
        %v1540 = vpop.f32.mrf.mxu0
        %v1541 = vadd.f32 %v1471, %v1540
        %1542 = vmatmul.f32.gmra.mxu0 %v1503
        %v1543 = vpop.f32.mrf.mxu0
        %v1544 = vadd.f32 %v1475, %v1543
        %1545 = vmatmul.f32.gmra.mxu0 %v1506
        %v1546 = vpop.f32.mrf.mxu0
        %v1547 = vadd.f32 %v1479, %v1546
        %1548 = vmatmul.f32.gmra.mxu0 %v1509
        %v1549 = vpop.f32.mrf.mxu0
        %v1550 = vadd.f32 %v1483, %v1549
        %1551 = vmatmul.f32.gmra.mxu0 %v1512
        %v1552 = vpop.f32.mrf.mxu0
        %v1553 = vadd.f32 %v1487, %v1552
        %1554 = vmatmul.f32.gmra.mxu0 %v1515
        %v1555 = vpop.f32.mrf.mxu0
        %v1556 = vadd.f32 %v1491, %v1555
        %1557 = vdwg.mxu0
        %vm1558 = vcmp.gt.f32.partialorder %v1547, 0.0
        %vm1559 = vcmp.gt.f32.partialorder %v1550, 0.0
        %vm1560 = vcmp.gt.f32.partialorder %v1553, 0.0
        %vm1561 = vcmp.gt.f32.partialorder %v1556, 0.0
        %v1562 = vmul.f32 %v1547, 0.01
        %v1563 = vmul.f32 %v1550, 0.01
        %v1564 = vmul.f32 %v1553, 0.01
        %v1565 = vmul.f32 %v1556, 0.01
        %v1566 = vsel %vm1558, %v1547, %v1562
        %v1567 = vsel %vm1559, %v1550, %v1563
        %v1568 = vsel %vm1560, %v1553, %v1564
        %v1569 = vsel %vm1561, %v1556, %v1565
        %v1570 = vadd.f32 %v1535, %v1566
        %v1571 = vadd.f32 %v1538, %v1567
        %v1572 = vadd.f32 %v1541, %v1568
        %v1573 = vadd.f32 %v1544, %v1569
        %s1574 = scalar_lea.vmem %s1, 384
        %v1575 = vld [vmem:[%s1574] sm:$0xff]
        %v1576 = vld [vmem:[%s1574 + $0x8] sm:$0xff]
        %v1577 = vld [vmem:[%s1574 + $0x10] sm:$0xff]
        %v1578 = vld [vmem:[%s1574 + $0x18] sm:$0xff]
        %v1579 = vld [vmem:[%s1574 + $0x20] sm:$0xff]
        %v1580 = vld [vmem:[%s1574 + $0x28] sm:$0xff]
        %v1581 = vld [vmem:[%s1574 + $0x30] sm:$0xff]
        %v1582 = vld [vmem:[%s1574 + $0x38] sm:$0xff]
        %1583 = vset.pattern.permute.xlu0 6
        %1584 = vperm.xlu0 %1583, %v850
        %v1585 = vpop.permute.xlu0 %1584
        %1587 = vset.pattern.permute.xlu0 6
        %1588 = vperm.xlu0 %1587, %v851
        %v1589 = vpop.permute.xlu0 %1588
        %1591 = vset.pattern.permute.xlu0 6
        %1592 = vperm.xlu0 %1591, %v852
        %v1593 = vpop.permute.xlu0 %1592
        %1595 = vset.pattern.permute.xlu0 6
        %1596 = vperm.xlu0 %1595, %v853
        %v1597 = vpop.permute.xlu0 %1596
        %1599 = vset.pattern.permute.xlu0 6
        %1600 = vperm.xlu0 %1599, %v854
        %v1601 = vpop.permute.xlu0 %1600
        %1603 = vset.pattern.permute.xlu0 6
        %1604 = vperm.xlu0 %1603, %v855
        %v1605 = vpop.permute.xlu0 %1604
        %1607 = vset.pattern.permute.xlu0 6
        %1608 = vperm.xlu0 %1607, %v856
        %v1609 = vpop.permute.xlu0 %1608
        %1611 = vset.pattern.permute.xlu0 6
        %1612 = vperm.xlu0 %1611, %v857
        %v1613 = vpop.permute.xlu0 %1612
        %v1616 = vsel %vm906, %v1575, 0
        %v1619 = vsel %vm906, %v1576, 0
        %v1622 = vsel %vm906, %v1577, 0
        %v1625 = vsel %vm906, %v1578, 0
        %v1628 = vsel %vm906, %v1579, 0
        %v1631 = vsel %vm906, %v1580, 0
        %v1634 = vsel %vm906, %v1581, 0
        %v1637 = vsel %vm906, %v1582, 0
        %1639 = vmatpush.msra.mxu0 0.0
        %1640 = vmatpush.msra.mxu0 0.0
        %1641 = vmatpush.msra.mxu0 0.0
        %1642 = vmatpush.msra.mxu0 0.0
        %1643 = vmatpush.msra.mxu0 0.0
        %1644 = vmatpush.msra.mxu0 0.0
        %1645 = vmatpush.msra.mxu0 0.0
        %1646 = vmatpush.msra.mxu0 0.0
        %1647 = vmatpush.msra.mxu0 0.0
        %1648 = vmatpush.msra.mxu0 0.0
        %1649 = vmatpush.msra.mxu0 0.0
        %1650 = vmatpush.msra.mxu0 0.0
        %1651 = vmatpush.msra.mxu0 %v1573
        %1652 = vmatpush.msra.mxu0 %v1572
        %1653 = vmatpush.msra.mxu0 %v1571
        %1654 = vmatpush.msra.mxu0 %v1570
        %1655 = vmatmul.f32.gmra.mxu0 %v1616
        %v1656 = vpop.f32.mrf.mxu0
        %v1657 = vadd.f32 %v1585, %v1656
        %1658 = vmatmul.f32.gmra.mxu0 %v1619
        %v1659 = vpop.f32.mrf.mxu0
        %v1660 = vadd.f32 %v1589, %v1659
        %1661 = vmatmul.f32.gmra.mxu0 %v1622
        %v1662 = vpop.f32.mrf.mxu0
        %v1663 = vadd.f32 %v1593, %v1662
        %1664 = vmatmul.f32.gmra.mxu0 %v1625
        %v1665 = vpop.f32.mrf.mxu0
        %v1666 = vadd.f32 %v1597, %v1665
        %1667 = vmatmul.f32.gmra.mxu0 %v1628
        %v1668 = vpop.f32.mrf.mxu0
        %v1669 = vadd.f32 %v1601, %v1668
        %1670 = vmatmul.f32.gmra.mxu0 %v1631
        %v1671 = vpop.f32.mrf.mxu0
        %v1672 = vadd.f32 %v1605, %v1671
        %1673 = vmatmul.f32.gmra.mxu0 %v1634
        %v1674 = vpop.f32.mrf.mxu0
        %v1675 = vadd.f32 %v1609, %v1674
        %1676 = vmatmul.f32.gmra.mxu0 %v1637
        %v1677 = vpop.f32.mrf.mxu0
        %v1678 = vadd.f32 %v1613, %v1677
        %1679 = vdwg.mxu0
        %vm1680 = vcmp.gt.f32.partialorder %v1669, 0.0
        %vm1681 = vcmp.gt.f32.partialorder %v1672, 0.0
        %vm1682 = vcmp.gt.f32.partialorder %v1675, 0.0
        %vm1683 = vcmp.gt.f32.partialorder %v1678, 0.0
        %v1684 = vmul.f32 %v1669, 0.01
        %v1685 = vmul.f32 %v1672, 0.01
        %v1686 = vmul.f32 %v1675, 0.01
        %v1687 = vmul.f32 %v1678, 0.01
        %v1688 = vsel %vm1680, %v1669, %v1684
        %v1689 = vsel %vm1681, %v1672, %v1685
        %v1690 = vsel %vm1682, %v1675, %v1686
        %v1691 = vsel %vm1683, %v1678, %v1687
        %v1692 = vadd.f32 %v1657, %v1688
        %v1693 = vadd.f32 %v1660, %v1689
        %v1694 = vadd.f32 %v1663, %v1690
        %v1695 = vadd.f32 %v1666, %v1691
        %s1696 = scalar_lea.vmem %s1, 448
        %v1697 = vld [vmem:[%s1696] sm:$0xff]
        %v1698 = vld [vmem:[%s1696 + $0x8] sm:$0xff]
        %v1699 = vld [vmem:[%s1696 + $0x10] sm:$0xff]
        %v1700 = vld [vmem:[%s1696 + $0x18] sm:$0xff]
        %v1701 = vld [vmem:[%s1696 + $0x20] sm:$0xff]
        %v1702 = vld [vmem:[%s1696 + $0x28] sm:$0xff]
        %v1703 = vld [vmem:[%s1696 + $0x30] sm:$0xff]
        %v1704 = vld [vmem:[%s1696 + $0x38] sm:$0xff]
        %1705 = vset.pattern.permute.xlu0 7
        %1706 = vperm.xlu0 %1705, %v850
        %v1707 = vpop.permute.xlu0 %1706
        %1709 = vset.pattern.permute.xlu0 7
        %1710 = vperm.xlu0 %1709, %v851
        %v1711 = vpop.permute.xlu0 %1710
        %1713 = vset.pattern.permute.xlu0 7
        %1714 = vperm.xlu0 %1713, %v852
        %v1715 = vpop.permute.xlu0 %1714
        %1717 = vset.pattern.permute.xlu0 7
        %1718 = vperm.xlu0 %1717, %v853
        %v1719 = vpop.permute.xlu0 %1718
        %1721 = vset.pattern.permute.xlu0 7
        %1722 = vperm.xlu0 %1721, %v854
        %v1723 = vpop.permute.xlu0 %1722
        %1725 = vset.pattern.permute.xlu0 7
        %1726 = vperm.xlu0 %1725, %v855
        %v1727 = vpop.permute.xlu0 %1726
        %1729 = vset.pattern.permute.xlu0 7
        %1730 = vperm.xlu0 %1729, %v856
        %v1731 = vpop.permute.xlu0 %1730
        %1733 = vset.pattern.permute.xlu0 7
        %1734 = vperm.xlu0 %1733, %v857
        %v1735 = vpop.permute.xlu0 %1734
        %v1738 = vsel %vm906, %v1697, 0
        %v1741 = vsel %vm906, %v1698, 0
        %v1744 = vsel %vm906, %v1699, 0
        %v1747 = vsel %vm906, %v1700, 0
        %v1750 = vsel %vm906, %v1701, 0
        %v1753 = vsel %vm906, %v1702, 0
        %v1756 = vsel %vm906, %v1703, 0
        %v1759 = vsel %vm906, %v1704, 0
        %1761 = vmatpush.msra.mxu0 0.0
        %1762 = vmatpush.msra.mxu0 0.0
        %1763 = vmatpush.msra.mxu0 0.0
        %1764 = vmatpush.msra.mxu0 0.0
        %1765 = vmatpush.msra.mxu0 0.0
        %1766 = vmatpush.msra.mxu0 0.0
        %1767 = vmatpush.msra.mxu0 0.0
        %1768 = vmatpush.msra.mxu0 0.0
        %1769 = vmatpush.msra.mxu0 0.0
        %1770 = vmatpush.msra.mxu0 0.0
        %1771 = vmatpush.msra.mxu0 0.0
        %1772 = vmatpush.msra.mxu0 0.0
        %1773 = vmatpush.msra.mxu0 %v1695
        %1774 = vmatpush.msra.mxu0 %v1694
        %1775 = vmatpush.msra.mxu0 %v1693
        %1776 = vmatpush.msra.mxu0 %v1692
        %1777 = vmatmul.f32.gmra.mxu0 %v1738
        %v1778 = vpop.f32.mrf.mxu0
        %v1779 = vadd.f32 %v1707, %v1778
        %1780 = vmatmul.f32.gmra.mxu0 %v1741
        %v1781 = vpop.f32.mrf.mxu0
        %v1782 = vadd.f32 %v1711, %v1781
        %1783 = vmatmul.f32.gmra.mxu0 %v1744
        %v1784 = vpop.f32.mrf.mxu0
        %v1785 = vadd.f32 %v1715, %v1784
        %1786 = vmatmul.f32.gmra.mxu0 %v1747
        %v1787 = vpop.f32.mrf.mxu0
        %v1788 = vadd.f32 %v1719, %v1787
        %1789 = vmatmul.f32.gmra.mxu0 %v1750
        %v1790 = vpop.f32.mrf.mxu0
        %v1791 = vadd.f32 %v1723, %v1790
        %1792 = vmatmul.f32.gmra.mxu0 %v1753
        %v1793 = vpop.f32.mrf.mxu0
        %v1794 = vadd.f32 %v1727, %v1793
        %1795 = vmatmul.f32.gmra.mxu0 %v1756
        %v1796 = vpop.f32.mrf.mxu0
        %v1797 = vadd.f32 %v1731, %v1796
        %1798 = vmatmul.f32.gmra.mxu0 %v1759
        %v1799 = vpop.f32.mrf.mxu0
        %v1800 = vadd.f32 %v1735, %v1799
        %1801 = vdwg.mxu0
        %vm1802 = vcmp.gt.f32.partialorder %v1779, 0.0
        %vm1803 = vcmp.gt.f32.partialorder %v1782, 0.0
        %vm1804 = vcmp.gt.f32.partialorder %v1785, 0.0
        %vm1805 = vcmp.gt.f32.partialorder %v1788, 0.0
        %vm1806 = vcmp.gt.f32.partialorder %v1791, 0.0
        %vm1807 = vcmp.gt.f32.partialorder %v1794, 0.0
        %vm1808 = vcmp.gt.f32.partialorder %v1797, 0.0
        %vm1809 = vcmp.gt.f32.partialorder %v1800, 0.0
        %v1810 = vmul.f32 %v1779, 0.01
        %v1811 = vmul.f32 %v1782, 0.01
        %v1812 = vmul.f32 %v1785, 0.01
        %v1813 = vmul.f32 %v1788, 0.01
        %v1814 = vmul.f32 %v1791, 0.01
        %v1815 = vmul.f32 %v1794, 0.01
        %v1816 = vmul.f32 %v1797, 0.01
        %v1817 = vmul.f32 %v1800, 0.01
        %v1818 = vsel %vm1802, %v1779, %v1810
        %v1819 = vsel %vm1803, %v1782, %v1811
        %v1820 = vsel %vm1804, %v1785, %v1812
        %v1821 = vsel %vm1805, %v1788, %v1813
        %v1822 = vsel %vm1806, %v1791, %v1814
        %v1823 = vsel %vm1807, %v1794, %v1815
        %v1824 = vsel %vm1808, %v1797, %v1816
        %v1825 = vsel %vm1809, %v1800, %v1817
        %v1826 = vld [vmem:[%s2] sm:$0x3]
        %1827 = vset.pattern.permute.xlu0 8
        %1828 = vperm.xlu0 %1827, %v850
        %v1829 = vpop.permute.xlu0 %1828
        %vm1831 = vcmask 523264
        %v1833 = vsel %vm1831, %v1826, 0
        %1835 = vmatpush.msra.mxu0 0.0
        %1836 = vmatpush.msra.mxu0 0.0
        %1837 = vmatpush.msra.mxu0 0.0
        %1838 = vmatpush.msra.mxu0 0.0
        %1839 = vmatpush.msra.mxu0 0.0
        %1840 = vmatpush.msra.mxu0 0.0
        %1841 = vmatpush.msra.mxu0 0.0
        %1842 = vmatpush.msra.mxu0 0.0
        %1843 = vmatpush.msra.mxu0 %v1825
        %1844 = vmatpush.msra.mxu0 %v1824
        %1845 = vmatpush.msra.mxu0 %v1823
        %1846 = vmatpush.msra.mxu0 %v1822
        %1847 = vmatpush.msra.mxu0 %v1821
        %1848 = vmatpush.msra.mxu0 %v1820
        %1849 = vmatpush.msra.mxu0 %v1819
        %1850 = vmatpush.msra.mxu0 %v1818
        %1851 = vmatmul.f32.gmra.mxu0 %v1833
        %v1852 = vpop.f32.mrf.mxu0
        %v1853 = vadd.f32 %v1829, %v1852
        %1854 = vdwg.mxu0
        %v1855 = vadd.f32 %v1853, %v208
        %1856 = vst [vmem:[%s207] sm:$0x3] %v1855
        %s1857 = sand.u32 %s93, 1
        %s1858 = scalar_lea.sflag [#allocation4], %s1857
        %s1859 = sand.u32 %s93, 1
        %s1860 = smul.addr %s1859, 2
        %s1861 = scalar_lea.vmem [#allocation3], %s1860
        // Predicated region
        $region71: #{tpu_custom_call.1} parent=65 // pred_check
          %p1862 = pneg %p103
        $region72: #{tpu_custom_call.1} parent=65 // pred_check_branch
          %1864 = sbr.rel (%p1862) target = $region74
        $region73: #{tpu_custom_call.1} parent=65 // pred_region
          %1866 = vsyncadd %s1858, 0
          %s1867 = smul.addr %s17, 2
          %s1868 = scalar_lea.hbm %s3, %s1867
          %s1870 = sshll.u32 %s1861, 4
          %s1871 = int_to_ptr.vmem [resolvable:$true] %s1870
          %s1872 = sshll.u32 %s1868, 4
          %s1873 = int_to_ptr.hbm [resolvable:$true] %s1872
          %1875 = dma.vmem_to_hbm [thread:$0]  %s1871, 32, %s1873, %s1858
        $region74: #{tpu_custom_call.1} parent=65 // pred_fallthru
          _
      $region66: #{tpu_custom_call.1} parent=5 // pred_fallthru
        _
      %p1876 = scmp.le.s32.totalorder 2, %s12
      // Predicated region
      $region75: #{tpu_custom_call.1} parent=5 // pred_check
        %p1877 = pneg %p1876
      $region76: #{tpu_custom_call.1} parent=5 // pred_check_branch
        %1879 = sbr.rel (%p1877) target = $region78
      $region77: #{tpu_custom_call.1} parent=5 // pred_region
        %s1880 = ssub.s32 %s12, 2
        // Predicated region
        $region79: #{tpu_custom_call.1} parent=77 // pred_check
          %p1881 = pneg %p109
        $region80: #{tpu_custom_call.1} parent=77 // pred_check_branch
          %1883 = sbr.rel (%p1881) target = $region82
        $region81: #{tpu_custom_call.1} parent=77 // pred_region
          %s1884 = sand.u32 %s94, 1
          %s1885 = scalar_lea.sflag [#allocation4], %s1884
          %s1886 = sand.u32 %s94, 1
          %s1887 = smul.addr %s1886, 2
          %s1888 = scalar_lea.vmem [#allocation3], %s1887
          %1890 = dma.done %s1885, 32
        $region82: #{tpu_custom_call.1} parent=77 // pred_fallthru
          _
      $region78: #{tpu_custom_call.1} parent=5 // pred_fallthru
        _
    $region6: #{tpu_custom_call.1} parent=1 // loop_footer
      %s16 = sadd.s32 1, %s12
    $region7: #{tpu_custom_call.1} parent=1 // loop_footer_branch
      %11 = sbr.rel target = $region3
    $region8: #{tpu_custom_call.1} parent=1 // loop_exit
      _
    %1891 = vsyncpa [#allocation4], 1
    %s1892 = scalar_lea.sflag [#allocation4], 1
    %1893 = vsyncpa %s1892, 1

</llo_original>
